<compile_context>
chip_gen: v5e
topology: v5e:2x2
jax: 0.10.0
libtpu: 0.0.40
codegen_flags: <defaults>
</compile_context>

<pallas_src>
import jax
import jax.numpy as jnp
from jax import lax
from jax.experimental import pallas as pl
from jax.experimental.pallas import tpu as pltpu


# -------------------- pre-processor: per-voxel mean pooling --------------------

def _voxel_mean_kernel(feat_ref, npts_ref, out_ref):
    # feat: [TN, P, C] (points zero-padded past num_points), npts: [TN, 1] (float)
    s = jnp.sum(feat_ref[...], axis=1)
    out_ref[...] = s / jnp.maximum(npts_ref[...], 1.0)


def voxel_mean(voxel_features, voxel_num_points, block_n=256):
    N, P, C = voxel_features.shape
    tn = min(block_n, ((N + 7) // 8) * 8)
    n_pad = ((N + tn - 1) // tn) * tn
    feat = jnp.pad(voxel_features.astype(jnp.float32),
                   ((0, n_pad - N), (0, 0), (0, 0)))
    npts = jnp.pad(voxel_num_points.astype(jnp.float32),
                   (0, n_pad - N)).reshape(n_pad, 1)
    out = pl.pallas_call(
        _voxel_mean_kernel,
        out_shape=jax.ShapeDtypeStruct((n_pad, C), jnp.float32),
        grid=(n_pad // tn,),
        in_specs=[pl.BlockSpec((tn, P, C), lambda i: (i, 0, 0)),
                  pl.BlockSpec((tn, 1), lambda i: (i, 0))],
        out_specs=pl.BlockSpec((tn, C), lambda i: (i, 0)),
        compiler_params=pltpu.CompilerParams(dimension_semantics=("parallel",)),
    )(feat, npts)
    return out[:N]


# ------------- fused backbone (2x conv3x3+ReLU) + max fusion + head -------------

def _fused_backbone_head_kernel(sid_ref,                     # scalar prefetch (SMEM)
                                x_ref,                       # (1, H+4, Wo+2, Cin) f32
                                w1_ref, b1_ref,              # (9,Cin,C1) bf16 / (1,C1)
                                w2_ref, b2_ref,              # (9,C1,C2) bf16 / (1,C2)
                                wht_ref, bh_ref,             # (A+R,C2) / (A+R,1) f32
                                cls_ref, reg_ref,            # (1,A,HW) / (1,R,HW)
                                y1_ref, fmax_ref):           # VMEM scratch
    a = pl.program_id(0)
    n_agents = pl.num_programs(0)

    Cin = x_ref.shape[-1]
    Ho, Wo, C1 = y1_ref.shape            # conv1 padded domain: (H+2, rnd8(W+2))
    HW, C2 = fmax_ref.shape
    H = Ho - 2
    W = HW // H
    A = cls_ref.shape[1]
    R = reg_ref.shape[1]

    # ---- conv1: 3x3 'same' conv + ReLU, evaluated on the padded (Ho, Wo) domain ----
    # Per-tap MXU matmuls, bf16 operands, f32 accumulation.
    # TODO(synk): a single fat-K (Ho*Wo, 9*Cin) im2col matmul needs a minor-dim concat
    # (lane-offset assembly); kept per-tap to stay on well-supported lowerings.
    acc1 = jnp.zeros((Ho * Wo, C1), jnp.float32)
    for t in range(9):
        ky, kx = t // 3, t % 3
        tap = x_ref[0, ky:ky + Ho, kx:kx + Wo, :].reshape(Ho * Wo, Cin)
        acc1 = acc1 + jnp.dot(tap.astype(jnp.bfloat16), w1_ref[t],
                              preferred_element_type=jnp.float32)
    y1 = jnp.maximum(acc1 + b1_ref[...], 0.0).reshape(Ho, Wo, C1)

    # Zero everything outside the true HxW grid (placed at offset (1, 1)) so conv2
    # reads an exact zero halo == 'same' zero padding; only full aligned VMEM stores.
    rr = lax.broadcasted_iota(jnp.int32, (Ho, Wo, C1), 0)
    cc = lax.broadcasted_iota(jnp.int32, (Ho, Wo, C1), 1)
    interior = (rr >= 1) & (rr <= H) & (cc >= 1) & (cc <= W)
    y1_ref[...] = jnp.where(interior, y1, 0.0)

    # ---- conv2: 3x3 'same' conv + ReLU from the VMEM-resident conv1 output ----
    acc2 = jnp.zeros((HW, C2), jnp.float32)
    for t in range(9):
        ky, kx = t // 3, t % 3
        tap = y1_ref[ky:ky + H, kx:kx + W, :].reshape(HW, C1).astype(jnp.bfloat16)
        acc2 = acc2 + jnp.dot(tap, w2_ref[t], preferred_element_type=jnp.float32)
    y2 = jnp.maximum(acc2 + b2_ref[...], 0.0)                   # (HW, C2) f32

    # ---- intermediate fusion: running max over the agents of one sample (VMEM) ----
    sid = sid_ref[a]
    prev_sid = sid_ref[jnp.maximum(a - 1, 0)]
    next_sid = sid_ref[jnp.minimum(a + 1, n_agents - 1)]
    is_first = jnp.logical_or(a == 0, sid != prev_sid)
    is_last = jnp.logical_or(a == n_agents - 1, sid != next_sid)

    @pl.when(is_first)
    def _():
        fmax_ref[...] = y2

    @pl.when(jnp.logical_not(is_first))
    def _():
        fmax_ref[...] = jnp.maximum(fmax_ref[...], y2)

    # ---- merged cls/reg 1x1 head on the last agent of each sample ----
    # (A+R, C2) x (HW, C2)^T contraction -> channel-major (A+R, HW): lane-dense store.
    @pl.when(is_last)
    def _():
        h = lax.dot_general(wht_ref[...], fmax_ref[...],
                            dimension_numbers=(((1,), (1,)), ((), ())),
                            preferred_element_type=jnp.float32) + bh_ref[...]
        cls_ref[...] = h[:A, :].reshape(1, A, HW)
        reg_ref[...] = h[A:, :].reshape(1, R, HW)


# ----------------------------- forward wrapper -----------------------------

def rtnh_intermediate_forward(data_dict, params, grid_hw):
    H, W = grid_hw
    vf = data_dict["processed_radar"]["voxel_features"]
    vc = data_dict["processed_radar"]["voxel_coords"]
    vn = data_dict["processed_radar"]["voxel_num_points"]
    record_len = data_dict["record_len"]
    num_agents = int(sum(record_len))
    B = len(record_len)

    C_pt = vf.shape[-1]
    C1 = params["w1"].shape[-1]
    C2 = params["w2"].shape[-1]
    A = params["w_cls"].shape[-1]
    R = params["w_reg"].shape[-1]
    HW = H * W

    # RadarSparseProcessor: per-voxel mean over valid radar points (Pallas).
    pillar = voxel_mean(vf, vn)                                   # [N, C_pt] f32

    # Densify onto the BEV grid, written directly into the conv-1 staging buffer
    # (already zero-padded; no separate jnp.pad copies anywhere in the pipeline).
    # TODO(synk): spconv 3D sparse backbone is approximated by dense BEV convs after
    # collapsing z; the scatter itself is left to XLA (a scalar-prefetch Pallas scatter
    # into this buffer would remove one more HBM write+read at production sizes).
    Wo = ((W + 2 + 7) // 8) * 8          # conv1 padded-domain width, sublane aligned
    H4, W4 = H + 4, Wo + 2
    xpad = jnp.zeros((num_agents, H4, W4, C_pt), jnp.float32)
    xpad = xpad.at[vc[:, 0], vc[:, 2] + 2, vc[:, 3] + 2, :].set(pillar)

    # Host-side weight packing (once): conv weights flattened per tap (bf16 operands),
    # cls/reg head merged into a single channel-major weight.
    w1 = params["w1"].reshape(9, C_pt, C1).astype(jnp.bfloat16)
    w2 = params["w2"].reshape(9, C1, C2).astype(jnp.bfloat16)
    b1 = params["b1"].reshape(1, C1).astype(jnp.float32)
    b2 = params["b2"].reshape(1, C2).astype(jnp.float32)
    wht = jnp.concatenate([params["w_cls"], params["w_reg"]], axis=1).T   # (A+R, C2)
    bh = jnp.concatenate([params["b_cls"], params["b_reg"]]).reshape(A + R, 1)

    sample_ids = jnp.asarray(
        [s for s, n in enumerate(record_len) for _ in range(n)], dtype=jnp.int32)

    grid_spec = pltpu.PrefetchScalarGridSpec(
        num_scalar_prefetch=1,
        grid=(num_agents,),
        in_specs=[
            pl.BlockSpec((1, H4, W4, C_pt), lambda a, sid: (a, 0, 0, 0)),
            pl.BlockSpec((9, C_pt, C1), lambda a, sid: (0, 0, 0)),
            pl.BlockSpec((1, C1), lambda a, sid: (0, 0)),
            pl.BlockSpec((9, C1, C2), lambda a, sid: (0, 0, 0)),
            pl.BlockSpec((1, C2), lambda a, sid: (0, 0)),
            pl.BlockSpec((A + R, C2), lambda a, sid: (0, 0)),
            pl.BlockSpec((A + R, 1), lambda a, sid: (0, 0)),
        ],
        out_specs=(
            pl.BlockSpec((1, A, HW), lambda a, sid: (sid[a], 0, 0)),
            pl.BlockSpec((1, R, HW), lambda a, sid: (sid[a], 0, 0)),
        ),
        scratch_shapes=[
            pltpu.VMEM((H + 2, Wo, C1), jnp.float32),   # conv1 output with zero halo
            pltpu.VMEM((HW, C2), jnp.float32),          # running max over agents
        ],
    )
    # TODO(synk): at production BEV resolutions add spatial row-strip tiling (extra
    # grid axis with a 1-row halo) and scratch-resident conv accumulators so the fused
    # kernel also fits v7x's 64 MiB VMEM and balances its 2 TensorCores.
    cls_f, reg_f = pl.pallas_call(
        _fused_backbone_head_kernel,
        out_shape=(jax.ShapeDtypeStruct((B, A, HW), jnp.float32),
                   jax.ShapeDtypeStruct((B, R, HW), jnp.float32)),
        grid_spec=grid_spec,
        compiler_params=pltpu.CompilerParams(
            dimension_semantics=("arbitrary",)),   # scratch carries across agents
    )(sample_ids, xpad, w1, b1, w2, b2, wht, bh)

    # Outputs are already channel-major (NCHW-flattened): plain reshape, no transpose.
    return {"psm": cls_f.reshape(B, A, H, W),
            "rm": reg_f.reshape(B, R, H, W)}


# ----------------------------- main -----------------------------

if __name__ == "__main__":
    key = jax.random.PRNGKey(0)

    # small synthetic config
    H, W = 16, 16        # BEV grid
    P = 8                # max points per voxel
    C_pt = 4             # radar point feature dim (x, y, z, power)
    C1, C2 = 32, 32      # backbone channels
    A = 2                # anchors per location
    BOX = 7              # box code size
    record_len = [2, 1]  # 2 samples, 3 agents total
    n_per_agent = [21, 21, 22]
    num_agents = sum(record_len)
    N = sum(n_per_agent)

    keys = jax.random.split(key, 16)

    # synthetic voxelized radar input
    voxel_features = jax.random.normal(keys[0], (N, P, C_pt), jnp.float32)
    voxel_num_points = jax.random.randint(keys[1], (N,), 1, P + 1)
    pt_idx = jnp.arange(P)[None, :, None]
    mask = (pt_idx < voxel_num_points[:, None, None]).astype(jnp.float32)
    voxel_features = voxel_features * mask   # zero-pad beyond num_points

    coords = []
    for a in range(num_agents):
        perm = jax.random.permutation(keys[2 + a], H * W)[:n_per_agent[a]]
        ys, xs = perm // W, perm % W
        coords.append(jnp.stack([jnp.full_like(ys, a), jnp.zeros_like(ys), ys, xs],
                                axis=1))
    voxel_coords = jnp.concatenate(coords, axis=0).astype(jnp.int32)  # (batch,z,y,x)

    # deterministic parameter init
    def init(k, shape, scale=0.1):
        return scale * jax.random.normal(k, shape, jnp.float32)

    params = {
        "w1": init(keys[6], (3, 3, C_pt, C1)), "b1": init(keys[7], (C1,)),
        "w2": init(keys[8], (3, 3, C1, C2)),   "b2": init(keys[9], (C2,)),
        "w_cls": init(keys[10], (C2, A)),          "b_cls": init(keys[11], (A,)),
        "w_reg": init(keys[12], (C2, A * BOX)),    "b_reg": init(keys[13], (A * BOX,)),
    }

    data_dict = {
        "processed_radar": {
            "voxel_features": voxel_features,
            "voxel_coords": voxel_coords,
            "voxel_num_points": voxel_num_points,
        },
        "record_len": record_len,
    }

    out = rtnh_intermediate_forward(data_dict, params, (H, W))
    jax.block_until_ready(out["psm"])
    jax.block_until_ready(out["rm"])
    assert out["psm"].shape == (len(record_len), A, H, W)
    assert out["rm"].shape == (len(record_len), A * BOX, H, W)
    print("KERNEL_OK")
</pallas_src>

<mosaic_0001>
module attributes {stable_mosaic.version = 11 : i64} {
  func.func @_voxel_mean_kernel(%arg0: i32, %arg1: memref<64x8x4xf32, #tpu.memory_space<vmem>>, %arg2: memref<64x1xf32, #tpu.memory_space<vmem>>, %arg3: memref<64x4xf32, #tpu.memory_space<vmem>>) attributes {dimension_semantics = [#tpu.dimension_semantics<parallel>], iteration_bounds = array<i64: 1>, scalar_prefetch = 0 : i64, scratch_operands = 0 : i64, tpu.core_type = #tpu.core_type<tc>, window_params = [{transform_indices = @transform_0, window_bounds = array<i64: 64, 8, 4>}, {transform_indices = @transform_1, window_bounds = array<i64: 64, 1>}, {transform_indices = @transform_2, window_bounds = array<i64: 64, 4>}]} {
    %c0 = arith.constant 0 : index
    %c0_0 = arith.constant 0 : index
    %c0_1 = arith.constant 0 : index
    %0 = vector.load %arg1[%c0, %c0_0, %c0_1] : memref<64x8x4xf32, #tpu.memory_space<vmem>>, vector<64x8x4xf32>
    %cst = arith.constant dense<0.000000e+00> : vector<64x4xf32>
    %1 = vector.multi_reduction <add>, %0, %cst [1] : vector<64x8x4xf32> to vector<64x4xf32>
    %c0_2 = arith.constant 0 : index
    %c0_3 = arith.constant 0 : index
    %2 = vector.load %arg2[%c0_2, %c0_3] : memref<64x1xf32, #tpu.memory_space<vmem>>, vector<64x1xf32>
    %cst_4 = arith.constant 1.000000e+00 : f32
    %3 = vector.broadcast %cst_4 : f32 to vector<64x1xf32>
    %4 = arith.maximumf %2, %3 : vector<64x1xf32>
    %5 = vector.broadcast %4 : vector<64x1xf32> to vector<64x4xf32>
    %6 = arith.divf %1, %5 : vector<64x4xf32>
    %c0_5 = arith.constant 0 : index
    %c0_6 = arith.constant 0 : index
    %7 = vector.load %arg3[%c0_5, %c0_6] : memref<64x4xf32, #tpu.memory_space<vmem>>, vector<64x4xf32>
    tpu.vector_store %arg3[%c0_5, %c0_6], %6 {strides = array<i32>} : memref<64x4xf32, #tpu.memory_space<vmem>>, vector<64x4xf32>,
    return
  }
  func.func @transform_0(%arg0: i32) -> (i32, i32, i32) {
    %c0_i32 = arith.constant 0 : i32
    %c0_i32_0 = arith.constant 0 : i32
    %c0_i32_1 = arith.constant 0 : i32
    return %arg0, %c0_i32, %c0_i32_0 : i32, i32, i32
  }
  func.func @transform_1(%arg0: i32) -> (i32, i32) {
    %c0_i32 = arith.constant 0 : i32
    %c0_i32_0 = arith.constant 0 : i32
    return %arg0, %c0_i32 : i32, i32
  }
  func.func @transform_2(%arg0: i32) -> (i32, i32) {
    %c0_i32 = arith.constant 0 : i32
    %c0_i32_0 = arith.constant 0 : i32
    return %arg0, %c0_i32 : i32, i32
  }
}

</mosaic_0001>

<llo_original>
// kernel: tpu_custom_call.1
$region0: #{tpu_custom_call.1}
  #allocation0 [shape = 'u32[]', space=smem, size = 0x4, offset = 0x4, fixed_abs, tag = 'smem constant byte address 0x4 - core index']
  #allocation1 [shape = 'u32[72,128]{1,0:T(1,128)}', space=vmem, size = 0x9000, scoped, tag = 'internal scratch']
  %s0 = inlined_call_operand.vmem [shape: f32[64,8,4], index: 0, kind: input, shape index: {}]
  %s1 = inlined_call_operand.vmem [shape: f32[64,1], index: 1, kind: input, shape index: {}]
  %s2 = inlined_call_operand.vmem [shape: f32[64,4], index: 2, kind: output, shape index: {}]
  %s3 = sld [smem:[#allocation0]]
  $region18: #{tpu_custom_call.1} parent=0
    _
  %s5 = ssub.s32 1, %s3
  %s6 = scalar_select 0, %s5, %s3
  // Predicated region
  $region2: #{tpu_custom_call.1} parent=0 // pred_check
    _
  $region3: #{tpu_custom_call.1} parent=0 // pred_check_branch
    %8 = sbr.rel (0) target = $region5
  $region4: #{tpu_custom_call.1} parent=0 // pred_region
    _
  $region5: #{tpu_custom_call.1} parent=0 // pred_fallthru
    _
  // Predicated region
  $region6: #{tpu_custom_call.1} parent=0 // pred_check
    _
  $region7: #{tpu_custom_call.1} parent=0 // pred_check_branch
    %10 = sbr.rel (0) target = $region9
  $region8: #{tpu_custom_call.1} parent=0 // pred_region
    _
  $region9: #{tpu_custom_call.1} parent=0 // pred_fallthru
    _
  %v11 = vld [vmem:[%s0] sm:$0xff]
  %v12 = vld [vmem:[%s0 + $0x8] sm:$0xff]
  %v13 = vld [vmem:[%s0 + $0x10] sm:$0xff]
  %v14 = vld [vmem:[%s0 + $0x18] sm:$0xff]
  %v15 = vld [vmem:[%s0 + $0x20] sm:$0xff]
  %v16 = vld [vmem:[%s0 + $0x28] sm:$0xff]
  %v17 = vld [vmem:[%s0 + $0x30] sm:$0xff]
  %v18 = vld [vmem:[%s0 + $0x38] sm:$0xff]
  %v19 = vld [vmem:[%s0 + $0x40] sm:$0xff]
  %v20 = vld [vmem:[%s0 + $0x48] sm:$0xff]
  %v21 = vld [vmem:[%s0 + $0x50] sm:$0xff]
  %v22 = vld [vmem:[%s0 + $0x58] sm:$0xff]
  %v23 = vld [vmem:[%s0 + $0x60] sm:$0xff]
  %v24 = vld [vmem:[%s0 + $0x68] sm:$0xff]
  %v25 = vld [vmem:[%s0 + $0x70] sm:$0xff]
  %v26 = vld [vmem:[%s0 + $0x78] sm:$0xff]
  %v27 = vld [vmem:[%s0 + $0x80] sm:$0xff]
  %v28 = vld [vmem:[%s0 + $0x88] sm:$0xff]
  %v29 = vld [vmem:[%s0 + $0x90] sm:$0xff]
  %v30 = vld [vmem:[%s0 + $0x98] sm:$0xff]
  %v31 = vld [vmem:[%s0 + $0xa0] sm:$0xff]
  %v32 = vld [vmem:[%s0 + $0xa8] sm:$0xff]
  %v33 = vld [vmem:[%s0 + $0xb0] sm:$0xff]
  %v34 = vld [vmem:[%s0 + $0xb8] sm:$0xff]
  %v35 = vld [vmem:[%s0 + $0xc0] sm:$0xff]
  %v36 = vld [vmem:[%s0 + $0xc8] sm:$0xff]
  %v37 = vld [vmem:[%s0 + $0xd0] sm:$0xff]
  %v38 = vld [vmem:[%s0 + $0xd8] sm:$0xff]
  %v39 = vld [vmem:[%s0 + $0xe0] sm:$0xff]
  %v40 = vld [vmem:[%s0 + $0xe8] sm:$0xff]
  %v41 = vld [vmem:[%s0 + $0xf0] sm:$0xff]
  %v42 = vld [vmem:[%s0 + $0xf8] sm:$0xff]
  %v43 = vld [vmem:[%s0 + $0x100] sm:$0xff]
  %v44 = vld [vmem:[%s0 + $0x108] sm:$0xff]
  %v45 = vld [vmem:[%s0 + $0x110] sm:$0xff]
  %v46 = vld [vmem:[%s0 + $0x118] sm:$0xff]
  %v47 = vld [vmem:[%s0 + $0x120] sm:$0xff]
  %v48 = vld [vmem:[%s0 + $0x128] sm:$0xff]
  %v49 = vld [vmem:[%s0 + $0x130] sm:$0xff]
  %v50 = vld [vmem:[%s0 + $0x138] sm:$0xff]
  %v51 = vld [vmem:[%s0 + $0x140] sm:$0xff]
  %v52 = vld [vmem:[%s0 + $0x148] sm:$0xff]
  %v53 = vld [vmem:[%s0 + $0x150] sm:$0xff]
  %v54 = vld [vmem:[%s0 + $0x158] sm:$0xff]
  %v55 = vld [vmem:[%s0 + $0x160] sm:$0xff]
  %v56 = vld [vmem:[%s0 + $0x168] sm:$0xff]
  %v57 = vld [vmem:[%s0 + $0x170] sm:$0xff]
  %v58 = vld [vmem:[%s0 + $0x178] sm:$0xff]
  %v59 = vld [vmem:[%s0 + $0x180] sm:$0xff]
  %v60 = vld [vmem:[%s0 + $0x188] sm:$0xff]
  %v61 = vld [vmem:[%s0 + $0x190] sm:$0xff]
  %v62 = vld [vmem:[%s0 + $0x198] sm:$0xff]
  %v63 = vld [vmem:[%s0 + $0x1a0] sm:$0xff]
  %v64 = vld [vmem:[%s0 + $0x1a8] sm:$0xff]
  %v65 = vld [vmem:[%s0 + $0x1b0] sm:$0xff]
  %v66 = vld [vmem:[%s0 + $0x1b8] sm:$0xff]
  %v67 = vld [vmem:[%s0 + $0x1c0] sm:$0xff]
  %v68 = vld [vmem:[%s0 + $0x1c8] sm:$0xff]
  %v69 = vld [vmem:[%s0 + $0x1d0] sm:$0xff]
  %v70 = vld [vmem:[%s0 + $0x1d8] sm:$0xff]
  %v71 = vld [vmem:[%s0 + $0x1e0] sm:$0xff]
  %v72 = vld [vmem:[%s0 + $0x1e8] sm:$0xff]
  %v73 = vld [vmem:[%s0 + $0x1f0] sm:$0xff]
  %v74 = vld [vmem:[%s0 + $0x1f8] sm:$0xff]
  %vm75 = vcmask 31744
  %v76 = vsel %vm75, %v11, 0.0
  %v77 = vrot.slane %v76, 4
  %v78 = vadd.f32 %v76, %v77
  %v79 = vrot.slane %v78, 2
  %v80 = vadd.f32 %v78, %v79
  %v81 = vrot.slane %v80, 1
  %v82 = vadd.f32 %v80, %v81
  %v83 = vsel %vm75, %v12, 0.0
  %v84 = vrot.slane %v83, 4
  %v85 = vadd.f32 %v83, %v84
  %v86 = vrot.slane %v85, 2
  %v87 = vadd.f32 %v85, %v86
  %v88 = vrot.slane %v87, 1
  %v89 = vadd.f32 %v87, %v88
  %v90 = vsel %vm75, %v13, 0.0
  %v91 = vrot.slane %v90, 4
  %v92 = vadd.f32 %v90, %v91
  %v93 = vrot.slane %v92, 2
  %v94 = vadd.f32 %v92, %v93
  %v95 = vrot.slane %v94, 1
  %v96 = vadd.f32 %v94, %v95
  %v97 = vsel %vm75, %v14, 0.0
  %v98 = vrot.slane %v97, 4
  %v99 = vadd.f32 %v97, %v98
  %v100 = vrot.slane %v99, 2
  %v101 = vadd.f32 %v99, %v100
  %v102 = vrot.slane %v101, 1
  %v103 = vadd.f32 %v101, %v102
  %v104 = vsel %vm75, %v15, 0.0
  %v105 = vrot.slane %v104, 4
  %v106 = vadd.f32 %v104, %v105
  %v107 = vrot.slane %v106, 2
  %v108 = vadd.f32 %v106, %v107
  %v109 = vrot.slane %v108, 1
  %v110 = vadd.f32 %v108, %v109
  %v111 = vsel %vm75, %v16, 0.0
  %v112 = vrot.slane %v111, 4
  %v113 = vadd.f32 %v111, %v112
  %v114 = vrot.slane %v113, 2
  %v115 = vadd.f32 %v113, %v114
  %v116 = vrot.slane %v115, 1
  %v117 = vadd.f32 %v115, %v116
  %v118 = vsel %vm75, %v17, 0.0
  %v119 = vrot.slane %v118, 4
  %v120 = vadd.f32 %v118, %v119
  %v121 = vrot.slane %v120, 2
  %v122 = vadd.f32 %v120, %v121
  %v123 = vrot.slane %v122, 1
  %v124 = vadd.f32 %v122, %v123
  %v125 = vsel %vm75, %v18, 0.0
  %v126 = vrot.slane %v125, 4
  %v127 = vadd.f32 %v125, %v126
  %v128 = vrot.slane %v127, 2
  %v129 = vadd.f32 %v127, %v128
  %v130 = vrot.slane %v129, 1
  %v131 = vadd.f32 %v129, %v130
  %v132 = vsel %vm75, %v19, 0.0
  %v133 = vrot.slane %v132, 4
  %v134 = vadd.f32 %v132, %v133
  %v135 = vrot.slane %v134, 2
  %v136 = vadd.f32 %v134, %v135
  %v137 = vrot.slane %v136, 1
  %v138 = vadd.f32 %v136, %v137
  %v139 = vsel %vm75, %v20, 0.0
  %v140 = vrot.slane %v139, 4
  %v141 = vadd.f32 %v139, %v140
  %v142 = vrot.slane %v141, 2
  %v143 = vadd.f32 %v141, %v142
  %v144 = vrot.slane %v143, 1
  %v145 = vadd.f32 %v143, %v144
  %v146 = vsel %vm75, %v21, 0.0
  %v147 = vrot.slane %v146, 4
  %v148 = vadd.f32 %v146, %v147
  %v149 = vrot.slane %v148, 2
  %v150 = vadd.f32 %v148, %v149
  %v151 = vrot.slane %v150, 1
  %v152 = vadd.f32 %v150, %v151
  %v153 = vsel %vm75, %v22, 0.0
  %v154 = vrot.slane %v153, 4
  %v155 = vadd.f32 %v153, %v154
  %v156 = vrot.slane %v155, 2
  %v157 = vadd.f32 %v155, %v156
  %v158 = vrot.slane %v157, 1
  %v159 = vadd.f32 %v157, %v158
  %v160 = vsel %vm75, %v23, 0.0
  %v161 = vrot.slane %v160, 4
  %v162 = vadd.f32 %v160, %v161
  %v163 = vrot.slane %v162, 2
  %v164 = vadd.f32 %v162, %v163
  %v165 = vrot.slane %v164, 1
  %v166 = vadd.f32 %v164, %v165
  %v167 = vsel %vm75, %v24, 0.0
  %v168 = vrot.slane %v167, 4
  %v169 = vadd.f32 %v167, %v168
  %v170 = vrot.slane %v169, 2
  %v171 = vadd.f32 %v169, %v170
  %v172 = vrot.slane %v171, 1
  %v173 = vadd.f32 %v171, %v172
  %v174 = vsel %vm75, %v25, 0.0
  %v175 = vrot.slane %v174, 4
  %v176 = vadd.f32 %v174, %v175
  %v177 = vrot.slane %v176, 2
  %v178 = vadd.f32 %v176, %v177
  %v179 = vrot.slane %v178, 1
  %v180 = vadd.f32 %v178, %v179
  %v181 = vsel %vm75, %v26, 0.0
  %v182 = vrot.slane %v181, 4
  %v183 = vadd.f32 %v181, %v182
  %v184 = vrot.slane %v183, 2
  %v185 = vadd.f32 %v183, %v184
  %v186 = vrot.slane %v185, 1
  %v187 = vadd.f32 %v185, %v186
  %v188 = vsel %vm75, %v27, 0.0
  %v189 = vrot.slane %v188, 4
  %v190 = vadd.f32 %v188, %v189
  %v191 = vrot.slane %v190, 2
  %v192 = vadd.f32 %v190, %v191
  %v193 = vrot.slane %v192, 1
  %v194 = vadd.f32 %v192, %v193
  %v195 = vsel %vm75, %v28, 0.0
  %v196 = vrot.slane %v195, 4
  %v197 = vadd.f32 %v195, %v196
  %v198 = vrot.slane %v197, 2
  %v199 = vadd.f32 %v197, %v198
  %v200 = vrot.slane %v199, 1
  %v201 = vadd.f32 %v199, %v200
  %v202 = vsel %vm75, %v29, 0.0
  %v203 = vrot.slane %v202, 4
  %v204 = vadd.f32 %v202, %v203
  %v205 = vrot.slane %v204, 2
  %v206 = vadd.f32 %v204, %v205
  %v207 = vrot.slane %v206, 1
  %v208 = vadd.f32 %v206, %v207
  %v209 = vsel %vm75, %v30, 0.0
  %v210 = vrot.slane %v209, 4
  %v211 = vadd.f32 %v209, %v210
  %v212 = vrot.slane %v211, 2
  %v213 = vadd.f32 %v211, %v212
  %v214 = vrot.slane %v213, 1
  %v215 = vadd.f32 %v213, %v214
  %v216 = vsel %vm75, %v31, 0.0
  %v217 = vrot.slane %v216, 4
  %v218 = vadd.f32 %v216, %v217
  %v219 = vrot.slane %v218, 2
  %v220 = vadd.f32 %v218, %v219
  %v221 = vrot.slane %v220, 1
  %v222 = vadd.f32 %v220, %v221
  %v223 = vsel %vm75, %v32, 0.0
  %v224 = vrot.slane %v223, 4
  %v225 = vadd.f32 %v223, %v224
  %v226 = vrot.slane %v225, 2
  %v227 = vadd.f32 %v225, %v226
  %v228 = vrot.slane %v227, 1
  %v229 = vadd.f32 %v227, %v228
  %v230 = vsel %vm75, %v33, 0.0
  %v231 = vrot.slane %v230, 4
  %v232 = vadd.f32 %v230, %v231
  %v233 = vrot.slane %v232, 2
  %v234 = vadd.f32 %v232, %v233
  %v235 = vrot.slane %v234, 1
  %v236 = vadd.f32 %v234, %v235
  %v237 = vsel %vm75, %v34, 0.0
  %v238 = vrot.slane %v237, 4
  %v239 = vadd.f32 %v237, %v238
  %v240 = vrot.slane %v239, 2
  %v241 = vadd.f32 %v239, %v240
  %v242 = vrot.slane %v241, 1
  %v243 = vadd.f32 %v241, %v242
  %v244 = vsel %vm75, %v35, 0.0
  %v245 = vrot.slane %v244, 4
  %v246 = vadd.f32 %v244, %v245
  %v247 = vrot.slane %v246, 2
  %v248 = vadd.f32 %v246, %v247
  %v249 = vrot.slane %v248, 1
  %v250 = vadd.f32 %v248, %v249
  %v251 = vsel %vm75, %v36, 0.0
  %v252 = vrot.slane %v251, 4
  %v253 = vadd.f32 %v251, %v252
  %v254 = vrot.slane %v253, 2
  %v255 = vadd.f32 %v253, %v254
  %v256 = vrot.slane %v255, 1
  %v257 = vadd.f32 %v255, %v256
  %v258 = vsel %vm75, %v37, 0.0
  %v259 = vrot.slane %v258, 4
  %v260 = vadd.f32 %v258, %v259
  %v261 = vrot.slane %v260, 2
  %v262 = vadd.f32 %v260, %v261
  %v263 = vrot.slane %v262, 1
  %v264 = vadd.f32 %v262, %v263
  %v265 = vsel %vm75, %v38, 0.0
  %v266 = vrot.slane %v265, 4
  %v267 = vadd.f32 %v265, %v266
  %v268 = vrot.slane %v267, 2
  %v269 = vadd.f32 %v267, %v268
  %v270 = vrot.slane %v269, 1
  %v271 = vadd.f32 %v269, %v270
  %v272 = vsel %vm75, %v39, 0.0
  %v273 = vrot.slane %v272, 4
  %v274 = vadd.f32 %v272, %v273
  %v275 = vrot.slane %v274, 2
  %v276 = vadd.f32 %v274, %v275
  %v277 = vrot.slane %v276, 1
  %v278 = vadd.f32 %v276, %v277
  %v279 = vsel %vm75, %v40, 0.0
  %v280 = vrot.slane %v279, 4
  %v281 = vadd.f32 %v279, %v280
  %v282 = vrot.slane %v281, 2
  %v283 = vadd.f32 %v281, %v282
  %v284 = vrot.slane %v283, 1
  %v285 = vadd.f32 %v283, %v284
  %v286 = vsel %vm75, %v41, 0.0
  %v287 = vrot.slane %v286, 4
  %v288 = vadd.f32 %v286, %v287
  %v289 = vrot.slane %v288, 2
  %v290 = vadd.f32 %v288, %v289
  %v291 = vrot.slane %v290, 1
  %v292 = vadd.f32 %v290, %v291
  %v293 = vsel %vm75, %v42, 0.0
  %v294 = vrot.slane %v293, 4
  %v295 = vadd.f32 %v293, %v294
  %v296 = vrot.slane %v295, 2
  %v297 = vadd.f32 %v295, %v296
  %v298 = vrot.slane %v297, 1
  %v299 = vadd.f32 %v297, %v298
  %v300 = vsel %vm75, %v43, 0.0
  %v301 = vrot.slane %v300, 4
  %v302 = vadd.f32 %v300, %v301
  %v303 = vrot.slane %v302, 2
  %v304 = vadd.f32 %v302, %v303
  %v305 = vrot.slane %v304, 1
  %v306 = vadd.f32 %v304, %v305
  %v307 = vsel %vm75, %v44, 0.0
  %v308 = vrot.slane %v307, 4
  %v309 = vadd.f32 %v307, %v308
  %v310 = vrot.slane %v309, 2
  %v311 = vadd.f32 %v309, %v310
  %v312 = vrot.slane %v311, 1
  %v313 = vadd.f32 %v311, %v312
  %v314 = vsel %vm75, %v45, 0.0
  %v315 = vrot.slane %v314, 4
  %v316 = vadd.f32 %v314, %v315
  %v317 = vrot.slane %v316, 2
  %v318 = vadd.f32 %v316, %v317
  %v319 = vrot.slane %v318, 1
  %v320 = vadd.f32 %v318, %v319
  %v321 = vsel %vm75, %v46, 0.0
  %v322 = vrot.slane %v321, 4
  %v323 = vadd.f32 %v321, %v322
  %v324 = vrot.slane %v323, 2
  %v325 = vadd.f32 %v323, %v324
  %v326 = vrot.slane %v325, 1
  %v327 = vadd.f32 %v325, %v326
  %v328 = vsel %vm75, %v47, 0.0
  %v329 = vrot.slane %v328, 4
  %v330 = vadd.f32 %v328, %v329
  %v331 = vrot.slane %v330, 2
  %v332 = vadd.f32 %v330, %v331
  %v333 = vrot.slane %v332, 1
  %v334 = vadd.f32 %v332, %v333
  %v335 = vsel %vm75, %v48, 0.0
  %v336 = vrot.slane %v335, 4
  %v337 = vadd.f32 %v335, %v336
  %v338 = vrot.slane %v337, 2
  %v339 = vadd.f32 %v337, %v338
  %v340 = vrot.slane %v339, 1
  %v341 = vadd.f32 %v339, %v340
  %v342 = vsel %vm75, %v49, 0.0
  %v343 = vrot.slane %v342, 4
  %v344 = vadd.f32 %v342, %v343
  %v345 = vrot.slane %v344, 2
  %v346 = vadd.f32 %v344, %v345
  %v347 = vrot.slane %v346, 1
  %v348 = vadd.f32 %v346, %v347
  %v349 = vsel %vm75, %v50, 0.0
  %v350 = vrot.slane %v349, 4
  %v351 = vadd.f32 %v349, %v350
  %v352 = vrot.slane %v351, 2
  %v353 = vadd.f32 %v351, %v352
  %v354 = vrot.slane %v353, 1
  %v355 = vadd.f32 %v353, %v354
  %v356 = vsel %vm75, %v51, 0.0
  %v357 = vrot.slane %v356, 4
  %v358 = vadd.f32 %v356, %v357
  %v359 = vrot.slane %v358, 2
  %v360 = vadd.f32 %v358, %v359
  %v361 = vrot.slane %v360, 1
  %v362 = vadd.f32 %v360, %v361
  %v363 = vsel %vm75, %v52, 0.0
  %v364 = vrot.slane %v363, 4
  %v365 = vadd.f32 %v363, %v364
  %v366 = vrot.slane %v365, 2
  %v367 = vadd.f32 %v365, %v366
  %v368 = vrot.slane %v367, 1
  %v369 = vadd.f32 %v367, %v368
  %v370 = vsel %vm75, %v53, 0.0
  %v371 = vrot.slane %v370, 4
  %v372 = vadd.f32 %v370, %v371
  %v373 = vrot.slane %v372, 2
  %v374 = vadd.f32 %v372, %v373
  %v375 = vrot.slane %v374, 1
  %v376 = vadd.f32 %v374, %v375
  %v377 = vsel %vm75, %v54, 0.0
  %v378 = vrot.slane %v377, 4
  %v379 = vadd.f32 %v377, %v378
  %v380 = vrot.slane %v379, 2
  %v381 = vadd.f32 %v379, %v380
  %v382 = vrot.slane %v381, 1
  %v383 = vadd.f32 %v381, %v382
  %v384 = vsel %vm75, %v55, 0.0
  %v385 = vrot.slane %v384, 4
  %v386 = vadd.f32 %v384, %v385
  %v387 = vrot.slane %v386, 2
  %v388 = vadd.f32 %v386, %v387
  %v389 = vrot.slane %v388, 1
  %v390 = vadd.f32 %v388, %v389
  %v391 = vsel %vm75, %v56, 0.0
  %v392 = vrot.slane %v391, 4
  %v393 = vadd.f32 %v391, %v392
  %v394 = vrot.slane %v393, 2
  %v395 = vadd.f32 %v393, %v394
  %v396 = vrot.slane %v395, 1
  %v397 = vadd.f32 %v395, %v396
  %v398 = vsel %vm75, %v57, 0.0
  %v399 = vrot.slane %v398, 4
  %v400 = vadd.f32 %v398, %v399
  %v401 = vrot.slane %v400, 2
  %v402 = vadd.f32 %v400, %v401
  %v403 = vrot.slane %v402, 1
  %v404 = vadd.f32 %v402, %v403
  %v405 = vsel %vm75, %v58, 0.0
  %v406 = vrot.slane %v405, 4
  %v407 = vadd.f32 %v405, %v406
  %v408 = vrot.slane %v407, 2
  %v409 = vadd.f32 %v407, %v408
  %v410 = vrot.slane %v409, 1
  %v411 = vadd.f32 %v409, %v410
  %v412 = vsel %vm75, %v59, 0.0
  %v413 = vrot.slane %v412, 4
  %v414 = vadd.f32 %v412, %v413
  %v415 = vrot.slane %v414, 2
  %v416 = vadd.f32 %v414, %v415
  %v417 = vrot.slane %v416, 1
  %v418 = vadd.f32 %v416, %v417
  %v419 = vsel %vm75, %v60, 0.0
  %v420 = vrot.slane %v419, 4
  %v421 = vadd.f32 %v419, %v420
  %v422 = vrot.slane %v421, 2
  %v423 = vadd.f32 %v421, %v422
  %v424 = vrot.slane %v423, 1
  %v425 = vadd.f32 %v423, %v424
  %v426 = vsel %vm75, %v61, 0.0
  %v427 = vrot.slane %v426, 4
  %v428 = vadd.f32 %v426, %v427
  %v429 = vrot.slane %v428, 2
  %v430 = vadd.f32 %v428, %v429
  %v431 = vrot.slane %v430, 1
  %v432 = vadd.f32 %v430, %v431
  %v433 = vsel %vm75, %v62, 0.0
  %v434 = vrot.slane %v433, 4
  %v435 = vadd.f32 %v433, %v434
  %v436 = vrot.slane %v435, 2
  %v437 = vadd.f32 %v435, %v436
  %v438 = vrot.slane %v437, 1
  %v439 = vadd.f32 %v437, %v438
  %v440 = vsel %vm75, %v63, 0.0
  %v441 = vrot.slane %v440, 4
  %v442 = vadd.f32 %v440, %v441
  %v443 = vrot.slane %v442, 2
  %v444 = vadd.f32 %v442, %v443
  %v445 = vrot.slane %v444, 1
  %v446 = vadd.f32 %v444, %v445
  %v447 = vsel %vm75, %v64, 0.0
  %v448 = vrot.slane %v447, 4
  %v449 = vadd.f32 %v447, %v448
  %v450 = vrot.slane %v449, 2
  %v451 = vadd.f32 %v449, %v450
  %v452 = vrot.slane %v451, 1
  %v453 = vadd.f32 %v451, %v452
  %v454 = vsel %vm75, %v65, 0.0
  %v455 = vrot.slane %v454, 4
  %v456 = vadd.f32 %v454, %v455
  %v457 = vrot.slane %v456, 2
  %v458 = vadd.f32 %v456, %v457
  %v459 = vrot.slane %v458, 1
  %v460 = vadd.f32 %v458, %v459
  %v461 = vsel %vm75, %v66, 0.0
  %v462 = vrot.slane %v461, 4
  %v463 = vadd.f32 %v461, %v462
  %v464 = vrot.slane %v463, 2
  %v465 = vadd.f32 %v463, %v464
  %v466 = vrot.slane %v465, 1
  %v467 = vadd.f32 %v465, %v466
  %v468 = vsel %vm75, %v67, 0.0
  %v469 = vrot.slane %v468, 4
  %v470 = vadd.f32 %v468, %v469
  %v471 = vrot.slane %v470, 2
  %v472 = vadd.f32 %v470, %v471
  %v473 = vrot.slane %v472, 1
  %v474 = vadd.f32 %v472, %v473
  %v475 = vsel %vm75, %v68, 0.0
  %v476 = vrot.slane %v475, 4
  %v477 = vadd.f32 %v475, %v476
  %v478 = vrot.slane %v477, 2
  %v479 = vadd.f32 %v477, %v478
  %v480 = vrot.slane %v479, 1
  %v481 = vadd.f32 %v479, %v480
  %v482 = vsel %vm75, %v69, 0.0
  %v483 = vrot.slane %v482, 4
  %v484 = vadd.f32 %v482, %v483
  %v485 = vrot.slane %v484, 2
  %v486 = vadd.f32 %v484, %v485
  %v487 = vrot.slane %v486, 1
  %v488 = vadd.f32 %v486, %v487
  %v489 = vsel %vm75, %v70, 0.0
  %v490 = vrot.slane %v489, 4
  %v491 = vadd.f32 %v489, %v490
  %v492 = vrot.slane %v491, 2
  %v493 = vadd.f32 %v491, %v492
  %v494 = vrot.slane %v493, 1
  %v495 = vadd.f32 %v493, %v494
  %v496 = vsel %vm75, %v71, 0.0
  %v497 = vrot.slane %v496, 4
  %v498 = vadd.f32 %v496, %v497
  %v499 = vrot.slane %v498, 2
  %v500 = vadd.f32 %v498, %v499
  %v501 = vrot.slane %v500, 1
  %v502 = vadd.f32 %v500, %v501
  %v503 = vsel %vm75, %v72, 0.0
  %v504 = vrot.slane %v503, 4
  %v505 = vadd.f32 %v503, %v504
  %v506 = vrot.slane %v505, 2
  %v507 = vadd.f32 %v505, %v506
  %v508 = vrot.slane %v507, 1
  %v509 = vadd.f32 %v507, %v508
  %v510 = vsel %vm75, %v73, 0.0
  %v511 = vrot.slane %v510, 4
  %v512 = vadd.f32 %v510, %v511
  %v513 = vrot.slane %v512, 2
  %v514 = vadd.f32 %v512, %v513
  %v515 = vrot.slane %v514, 1
  %v516 = vadd.f32 %v514, %v515
  %v517 = vsel %vm75, %v74, 0.0
  %v518 = vrot.slane %v517, 4
  %v519 = vadd.f32 %v517, %v518
  %v520 = vrot.slane %v519, 2
  %v521 = vadd.f32 %v519, %v520
  %v522 = vrot.slane %v521, 1
  %v523 = vadd.f32 %v521, %v522
  %v524 = vld [vmem:[%s1] sm:$0xff]
  %v525 = vld [vmem:[%s1 + $0x8] sm:$0xff]
  %v526 = vld [vmem:[%s1 + $0x10] sm:$0xff]
  %v527 = vld [vmem:[%s1 + $0x18] sm:$0xff]
  %v528 = vld [vmem:[%s1 + $0x20] sm:$0xff]
  %v529 = vld [vmem:[%s1 + $0x28] sm:$0xff]
  %v530 = vld [vmem:[%s1 + $0x30] sm:$0xff]
  %v531 = vld [vmem:[%s1 + $0x38] sm:$0xff]
  %v532 = vmax.f32 %v524, 1.0
  %v533 = vmax.f32 %v525, 1.0
  %v534 = vmax.f32 %v526, 1.0
  %v535 = vmax.f32 %v527, 1.0
  %v536 = vmax.f32 %v528, 1.0
  %v537 = vmax.f32 %v529, 1.0
  %v538 = vmax.f32 %v530, 1.0
  %v539 = vmax.f32 %v531, 1.0
  %541 = vset.pattern.permute.xlu0 0
  %542 = vperm.xlu0 %541, %v532
  %v543 = vpop.permute.xlu0 %542
  %545 = vset.pattern.permute.xlu0 0
  %546 = vperm.xlu0 %545, %v533
  %v547 = vpop.permute.xlu0 %546
  %549 = vset.pattern.permute.xlu0 0
  %550 = vperm.xlu0 %549, %v534
  %v551 = vpop.permute.xlu0 %550
  %553 = vset.pattern.permute.xlu0 0
  %554 = vperm.xlu0 %553, %v535
  %v555 = vpop.permute.xlu0 %554
  %557 = vset.pattern.permute.xlu0 0
  %558 = vperm.xlu0 %557, %v536
  %v559 = vpop.permute.xlu0 %558
  %561 = vset.pattern.permute.xlu0 0
  %562 = vperm.xlu0 %561, %v537
  %v563 = vpop.permute.xlu0 %562
  %565 = vset.pattern.permute.xlu0 0
  %566 = vperm.xlu0 %565, %v538
  %v567 = vpop.permute.xlu0 %566
  %569 = vset.pattern.permute.xlu0 0
  %570 = vperm.xlu0 %569, %v539
  %v571 = vpop.permute.xlu0 %570
  %v572 = vrot.slane %v543, 1
  %v573 = vrot.slane %v543, 2
  %v574 = vrot.slane %v543, 3
  %v575 = vrot.slane %v543, 4
  %v576 = vrot.slane %v543, 5
  %v577 = vrot.slane %v543, 6
  %v578 = vrot.slane %v543, 7
  %v579 = vrot.slane %v547, 1
  %v580 = vrot.slane %v547, 2
  %v581 = vrot.slane %v547, 3
  %v582 = vrot.slane %v547, 4
  %v583 = vrot.slane %v547, 5
  %v584 = vrot.slane %v547, 6
  %v585 = vrot.slane %v547, 7
  %v586 = vrot.slane %v551, 1
  %v587 = vrot.slane %v551, 2
  %v588 = vrot.slane %v551, 3
  %v589 = vrot.slane %v551, 4
  %v590 = vrot.slane %v551, 5
  %v591 = vrot.slane %v551, 6
  %v592 = vrot.slane %v551, 7
  %v593 = vrot.slane %v555, 1
  %v594 = vrot.slane %v555, 2
  %v595 = vrot.slane %v555, 3
  %v596 = vrot.slane %v555, 4
  %v597 = vrot.slane %v555, 5
  %v598 = vrot.slane %v555, 6
  %v599 = vrot.slane %v555, 7
  %v600 = vrot.slane %v559, 1
  %v601 = vrot.slane %v559, 2
  %v602 = vrot.slane %v559, 3
  %v603 = vrot.slane %v559, 4
  %v604 = vrot.slane %v559, 5
  %v605 = vrot.slane %v559, 6
  %v606 = vrot.slane %v559, 7
  %v607 = vrot.slane %v563, 1
  %v608 = vrot.slane %v563, 2
  %v609 = vrot.slane %v563, 3
  %v610 = vrot.slane %v563, 4
  %v611 = vrot.slane %v563, 5
  %v612 = vrot.slane %v563, 6
  %v613 = vrot.slane %v563, 7
  %v614 = vrot.slane %v567, 1
  %v615 = vrot.slane %v567, 2
  %v616 = vrot.slane %v567, 3
  %v617 = vrot.slane %v567, 4
  %v618 = vrot.slane %v567, 5
  %v619 = vrot.slane %v567, 6
  %v620 = vrot.slane %v567, 7
  %v621 = vrot.slane %v571, 1
  %v622 = vrot.slane %v571, 2
  %v623 = vrot.slane %v571, 3
  %v624 = vrot.slane %v571, 4
  %v625 = vrot.slane %v571, 5
  %v626 = vrot.slane %v571, 6
  %v627 = vrot.slane %v571, 7
  %v692 = vrcp.pop %v543
  %v693 = vmul.f32 %v543, %v692
  %v694 = vsub.f32 1.0, %v693
  %v695 = vmul.f32 %v692, %v694
  %v696 = vadd.f32 %v692, %v695
  %vm697 = vweird.f32 %v543
  %vm698 = vweird.f32 %v692
  %vm699 = vmor %vm697, %vm698
  %v700 = vsel %vm699, %v692, %v696
  %v701 = vand.u32 2147483647, %v543
  %vm702 = vcmp.eq.f32.partialorder %v701, 8.507059e+37
  %v703 = vand.u32 %v543, 2147483648
  %v704 = vor.u32 1.1754944e-38, %v703
  %v705 = vsel %vm702, %v704, %v700
  %v706 = vmul.f32 %v82, %v705
  %v707 = vrcp.pop %v572
  %v708 = vmul.f32 %v572, %v707
  %v709 = vsub.f32 1.0, %v708
  %v710 = vmul.f32 %v707, %v709
  %v711 = vadd.f32 %v707, %v710
  %vm712 = vweird.f32 %v572
  %vm713 = vweird.f32 %v707
  %vm714 = vmor %vm712, %vm713
  %v715 = vsel %vm714, %v707, %v711
  %v716 = vand.u32 2147483647, %v572
  %vm717 = vcmp.eq.f32.partialorder %v716, 8.507059e+37
  %v718 = vand.u32 %v572, 2147483648
  %v719 = vor.u32 1.1754944e-38, %v718
  %v720 = vsel %vm717, %v719, %v715
  %v721 = vmul.f32 %v89, %v720
  %v722 = vrcp.pop %v573
  %v723 = vmul.f32 %v573, %v722
  %v724 = vsub.f32 1.0, %v723
  %v725 = vmul.f32 %v722, %v724
  %v726 = vadd.f32 %v722, %v725
  %vm727 = vweird.f32 %v573
  %vm728 = vweird.f32 %v722
  %vm729 = vmor %vm727, %vm728
  %v730 = vsel %vm729, %v722, %v726
  %v731 = vand.u32 2147483647, %v573
  %vm732 = vcmp.eq.f32.partialorder %v731, 8.507059e+37
  %v733 = vand.u32 %v573, 2147483648
  %v734 = vor.u32 1.1754944e-38, %v733
  %v735 = vsel %vm732, %v734, %v730
  %v736 = vmul.f32 %v96, %v735
  %v737 = vrcp.pop %v574
  %v738 = vmul.f32 %v574, %v737
  %v739 = vsub.f32 1.0, %v738
  %v740 = vmul.f32 %v737, %v739
  %v741 = vadd.f32 %v737, %v740
  %vm742 = vweird.f32 %v574
  %vm743 = vweird.f32 %v737
  %vm744 = vmor %vm742, %vm743
  %v745 = vsel %vm744, %v737, %v741
  %v746 = vand.u32 2147483647, %v574
  %vm747 = vcmp.eq.f32.partialorder %v746, 8.507059e+37
  %v748 = vand.u32 %v574, 2147483648
  %v749 = vor.u32 1.1754944e-38, %v748
  %v750 = vsel %vm747, %v749, %v745
  %v751 = vmul.f32 %v103, %v750
  %v752 = vrcp.pop %v575
  %v753 = vmul.f32 %v575, %v752
  %v754 = vsub.f32 1.0, %v753
  %v755 = vmul.f32 %v752, %v754
  %v756 = vadd.f32 %v752, %v755
  %vm757 = vweird.f32 %v575
  %vm758 = vweird.f32 %v752
  %vm759 = vmor %vm757, %vm758
  %v760 = vsel %vm759, %v752, %v756
  %v761 = vand.u32 2147483647, %v575
  %vm762 = vcmp.eq.f32.partialorder %v761, 8.507059e+37
  %v763 = vand.u32 %v575, 2147483648
  %v764 = vor.u32 1.1754944e-38, %v763
  %v765 = vsel %vm762, %v764, %v760
  %v766 = vmul.f32 %v110, %v765
  %v767 = vrcp.pop %v576
  %v768 = vmul.f32 %v576, %v767
  %v769 = vsub.f32 1.0, %v768
  %v770 = vmul.f32 %v767, %v769
  %v771 = vadd.f32 %v767, %v770
  %vm772 = vweird.f32 %v576
  %vm773 = vweird.f32 %v767
  %vm774 = vmor %vm772, %vm773
  %v775 = vsel %vm774, %v767, %v771
  %v776 = vand.u32 2147483647, %v576
  %vm777 = vcmp.eq.f32.partialorder %v776, 8.507059e+37
  %v778 = vand.u32 %v576, 2147483648
  %v779 = vor.u32 1.1754944e-38, %v778
  %v780 = vsel %vm777, %v779, %v775
  %v781 = vmul.f32 %v117, %v780
  %v782 = vrcp.pop %v577
  %v783 = vmul.f32 %v577, %v782
  %v784 = vsub.f32 1.0, %v783
  %v785 = vmul.f32 %v782, %v784
  %v786 = vadd.f32 %v782, %v785
  %vm787 = vweird.f32 %v577
  %vm788 = vweird.f32 %v782
  %vm789 = vmor %vm787, %vm788
  %v790 = vsel %vm789, %v782, %v786
  %v791 = vand.u32 2147483647, %v577
  %vm792 = vcmp.eq.f32.partialorder %v791, 8.507059e+37
  %v793 = vand.u32 %v577, 2147483648
  %v794 = vor.u32 1.1754944e-38, %v793
  %v795 = vsel %vm792, %v794, %v790
  %v796 = vmul.f32 %v124, %v795
  %v797 = vrcp.pop %v578
  %v798 = vmul.f32 %v578, %v797
  %v799 = vsub.f32 1.0, %v798
  %v800 = vmul.f32 %v797, %v799
  %v801 = vadd.f32 %v797, %v800
  %vm802 = vweird.f32 %v578
  %vm803 = vweird.f32 %v797
  %vm804 = vmor %vm802, %vm803
  %v805 = vsel %vm804, %v797, %v801
  %v806 = vand.u32 2147483647, %v578
  %vm807 = vcmp.eq.f32.partialorder %v806, 8.507059e+37
  %v808 = vand.u32 %v578, 2147483648
  %v809 = vor.u32 1.1754944e-38, %v808
  %v810 = vsel %vm807, %v809, %v805
  %v811 = vmul.f32 %v131, %v810
  %v812 = vrcp.pop %v547
  %v813 = vmul.f32 %v547, %v812
  %v814 = vsub.f32 1.0, %v813
  %v815 = vmul.f32 %v812, %v814
  %v816 = vadd.f32 %v812, %v815
  %vm817 = vweird.f32 %v547
  %vm818 = vweird.f32 %v812
  %vm819 = vmor %vm817, %vm818
  %v820 = vsel %vm819, %v812, %v816
  %v821 = vand.u32 2147483647, %v547
  %vm822 = vcmp.eq.f32.partialorder %v821, 8.507059e+37
  %v823 = vand.u32 %v547, 2147483648
  %v824 = vor.u32 1.1754944e-38, %v823
  %v825 = vsel %vm822, %v824, %v820
  %v826 = vmul.f32 %v138, %v825
  %v827 = vrcp.pop %v579
  %v828 = vmul.f32 %v579, %v827
  %v829 = vsub.f32 1.0, %v828
  %v830 = vmul.f32 %v827, %v829
  %v831 = vadd.f32 %v827, %v830
  %vm832 = vweird.f32 %v579
  %vm833 = vweird.f32 %v827
  %vm834 = vmor %vm832, %vm833
  %v835 = vsel %vm834, %v827, %v831
  %v836 = vand.u32 2147483647, %v579
  %vm837 = vcmp.eq.f32.partialorder %v836, 8.507059e+37
  %v838 = vand.u32 %v579, 2147483648
  %v839 = vor.u32 1.1754944e-38, %v838
  %v840 = vsel %vm837, %v839, %v835
  %v841 = vmul.f32 %v145, %v840
  %v842 = vrcp.pop %v580
  %v843 = vmul.f32 %v580, %v842
  %v844 = vsub.f32 1.0, %v843
  %v845 = vmul.f32 %v842, %v844
  %v846 = vadd.f32 %v842, %v845
  %vm847 = vweird.f32 %v580
  %vm848 = vweird.f32 %v842
  %vm849 = vmor %vm847, %vm848
  %v850 = vsel %vm849, %v842, %v846
  %v851 = vand.u32 2147483647, %v580
  %vm852 = vcmp.eq.f32.partialorder %v851, 8.507059e+37
  %v853 = vand.u32 %v580, 2147483648
  %v854 = vor.u32 1.1754944e-38, %v853
  %v855 = vsel %vm852, %v854, %v850
  %v856 = vmul.f32 %v152, %v855
  %v857 = vrcp.pop %v581
  %v858 = vmul.f32 %v581, %v857
  %v859 = vsub.f32 1.0, %v858
  %v860 = vmul.f32 %v857, %v859
  %v861 = vadd.f32 %v857, %v860
  %vm862 = vweird.f32 %v581
  %vm863 = vweird.f32 %v857
  %vm864 = vmor %vm862, %vm863
  %v865 = vsel %vm864, %v857, %v861
  %v866 = vand.u32 2147483647, %v581
  %vm867 = vcmp.eq.f32.partialorder %v866, 8.507059e+37
  %v868 = vand.u32 %v581, 2147483648
  %v869 = vor.u32 1.1754944e-38, %v868
  %v870 = vsel %vm867, %v869, %v865
  %v871 = vmul.f32 %v159, %v870
  %v872 = vrcp.pop %v582
  %v873 = vmul.f32 %v582, %v872
  %v874 = vsub.f32 1.0, %v873
  %v875 = vmul.f32 %v872, %v874
  %v876 = vadd.f32 %v872, %v875
  %vm877 = vweird.f32 %v582
  %vm878 = vweird.f32 %v872
  %vm879 = vmor %vm877, %vm878
  %v880 = vsel %vm879, %v872, %v876
  %v881 = vand.u32 2147483647, %v582
  %vm882 = vcmp.eq.f32.partialorder %v881, 8.507059e+37
  %v883 = vand.u32 %v582, 2147483648
  %v884 = vor.u32 1.1754944e-38, %v883
  %v885 = vsel %vm882, %v884, %v880
  %v886 = vmul.f32 %v166, %v885
  %v887 = vrcp.pop %v583
  %v888 = vmul.f32 %v583, %v887
  %v889 = vsub.f32 1.0, %v888
  %v890 = vmul.f32 %v887, %v889
  %v891 = vadd.f32 %v887, %v890
  %vm892 = vweird.f32 %v583
  %vm893 = vweird.f32 %v887
  %vm894 = vmor %vm892, %vm893
  %v895 = vsel %vm894, %v887, %v891
  %v896 = vand.u32 2147483647, %v583
  %vm897 = vcmp.eq.f32.partialorder %v896, 8.507059e+37
  %v898 = vand.u32 %v583, 2147483648
  %v899 = vor.u32 1.1754944e-38, %v898
  %v900 = vsel %vm897, %v899, %v895
  %v901 = vmul.f32 %v173, %v900
  %v902 = vrcp.pop %v584
  %v903 = vmul.f32 %v584, %v902
  %v904 = vsub.f32 1.0, %v903
  %v905 = vmul.f32 %v902, %v904
  %v906 = vadd.f32 %v902, %v905
  %vm907 = vweird.f32 %v584
  %vm908 = vweird.f32 %v902
  %vm909 = vmor %vm907, %vm908
  %v910 = vsel %vm909, %v902, %v906
  %v911 = vand.u32 2147483647, %v584
  %vm912 = vcmp.eq.f32.partialorder %v911, 8.507059e+37
  %v913 = vand.u32 %v584, 2147483648
  %v914 = vor.u32 1.1754944e-38, %v913
  %v915 = vsel %vm912, %v914, %v910
  %v916 = vmul.f32 %v180, %v915
  %v917 = vrcp.pop %v585
  %v918 = vmul.f32 %v585, %v917
  %v919 = vsub.f32 1.0, %v918
  %v920 = vmul.f32 %v917, %v919
  %v921 = vadd.f32 %v917, %v920
  %vm922 = vweird.f32 %v585
  %vm923 = vweird.f32 %v917
  %vm924 = vmor %vm922, %vm923
  %v925 = vsel %vm924, %v917, %v921
  %v926 = vand.u32 2147483647, %v585
  %vm927 = vcmp.eq.f32.partialorder %v926, 8.507059e+37
  %v928 = vand.u32 %v585, 2147483648
  %v929 = vor.u32 1.1754944e-38, %v928
  %v930 = vsel %vm927, %v929, %v925
  %v931 = vmul.f32 %v187, %v930
  %v932 = vrcp.pop %v551
  %v933 = vmul.f32 %v551, %v932
  %v934 = vsub.f32 1.0, %v933
  %v935 = vmul.f32 %v932, %v934
  %v936 = vadd.f32 %v932, %v935
  %vm937 = vweird.f32 %v551
  %vm938 = vweird.f32 %v932
  %vm939 = vmor %vm937, %vm938
  %v940 = vsel %vm939, %v932, %v936
  %v941 = vand.u32 2147483647, %v551
  %vm942 = vcmp.eq.f32.partialorder %v941, 8.507059e+37
  %v943 = vand.u32 %v551, 2147483648
  %v944 = vor.u32 1.1754944e-38, %v943
  %v945 = vsel %vm942, %v944, %v940
  %v946 = vmul.f32 %v194, %v945
  %v947 = vrcp.pop %v586
  %v948 = vmul.f32 %v586, %v947
  %v949 = vsub.f32 1.0, %v948
  %v950 = vmul.f32 %v947, %v949
  %v951 = vadd.f32 %v947, %v950
  %vm952 = vweird.f32 %v586
  %vm953 = vweird.f32 %v947
  %vm954 = vmor %vm952, %vm953
  %v955 = vsel %vm954, %v947, %v951
  %v956 = vand.u32 2147483647, %v586
  %vm957 = vcmp.eq.f32.partialorder %v956, 8.507059e+37
  %v958 = vand.u32 %v586, 2147483648
  %v959 = vor.u32 1.1754944e-38, %v958
  %v960 = vsel %vm957, %v959, %v955
  %v961 = vmul.f32 %v201, %v960
  %v962 = vrcp.pop %v587
  %v963 = vmul.f32 %v587, %v962
  %v964 = vsub.f32 1.0, %v963
  %v965 = vmul.f32 %v962, %v964
  %v966 = vadd.f32 %v962, %v965
  %vm967 = vweird.f32 %v587
  %vm968 = vweird.f32 %v962
  %vm969 = vmor %vm967, %vm968
  %v970 = vsel %vm969, %v962, %v966
  %v971 = vand.u32 2147483647, %v587
  %vm972 = vcmp.eq.f32.partialorder %v971, 8.507059e+37
  %v973 = vand.u32 %v587, 2147483648
  %v974 = vor.u32 1.1754944e-38, %v973
  %v975 = vsel %vm972, %v974, %v970
  %v976 = vmul.f32 %v208, %v975
  %v977 = vrcp.pop %v588
  %v978 = vmul.f32 %v588, %v977
  %v979 = vsub.f32 1.0, %v978
  %v980 = vmul.f32 %v977, %v979
  %v981 = vadd.f32 %v977, %v980
  %vm982 = vweird.f32 %v588
  %vm983 = vweird.f32 %v977
  %vm984 = vmor %vm982, %vm983
  %v985 = vsel %vm984, %v977, %v981
  %v986 = vand.u32 2147483647, %v588
  %vm987 = vcmp.eq.f32.partialorder %v986, 8.507059e+37
  %v988 = vand.u32 %v588, 2147483648
  %v989 = vor.u32 1.1754944e-38, %v988
  %v990 = vsel %vm987, %v989, %v985
  %v991 = vmul.f32 %v215, %v990
  %v992 = vrcp.pop %v589
  %v993 = vmul.f32 %v589, %v992
  %v994 = vsub.f32 1.0, %v993
  %v995 = vmul.f32 %v992, %v994
  %v996 = vadd.f32 %v992, %v995
  %vm997 = vweird.f32 %v589
  %vm998 = vweird.f32 %v992
  %vm999 = vmor %vm997, %vm998
  %v1000 = vsel %vm999, %v992, %v996
  %v1001 = vand.u32 2147483647, %v589
  %vm1002 = vcmp.eq.f32.partialorder %v1001, 8.507059e+37
  %v1003 = vand.u32 %v589, 2147483648
  %v1004 = vor.u32 1.1754944e-38, %v1003
  %v1005 = vsel %vm1002, %v1004, %v1000
  %v1006 = vmul.f32 %v222, %v1005
  %v1007 = vrcp.pop %v590
  %v1008 = vmul.f32 %v590, %v1007
  %v1009 = vsub.f32 1.0, %v1008
  %v1010 = vmul.f32 %v1007, %v1009
  %v1011 = vadd.f32 %v1007, %v1010
  %vm1012 = vweird.f32 %v590
  %vm1013 = vweird.f32 %v1007
  %vm1014 = vmor %vm1012, %vm1013
  %v1015 = vsel %vm1014, %v1007, %v1011
  %v1016 = vand.u32 2147483647, %v590
  %vm1017 = vcmp.eq.f32.partialorder %v1016, 8.507059e+37
  %v1018 = vand.u32 %v590, 2147483648
  %v1019 = vor.u32 1.1754944e-38, %v1018
  %v1020 = vsel %vm1017, %v1019, %v1015
  %v1021 = vmul.f32 %v229, %v1020
  %v1022 = vrcp.pop %v591
  %v1023 = vmul.f32 %v591, %v1022
  %v1024 = vsub.f32 1.0, %v1023
  %v1025 = vmul.f32 %v1022, %v1024
  %v1026 = vadd.f32 %v1022, %v1025
  %vm1027 = vweird.f32 %v591
  %vm1028 = vweird.f32 %v1022
  %vm1029 = vmor %vm1027, %vm1028
  %v1030 = vsel %vm1029, %v1022, %v1026
  %v1031 = vand.u32 2147483647, %v591
  %vm1032 = vcmp.eq.f32.partialorder %v1031, 8.507059e+37
  %v1033 = vand.u32 %v591, 2147483648
  %v1034 = vor.u32 1.1754944e-38, %v1033
  %v1035 = vsel %vm1032, %v1034, %v1030
  %v1036 = vmul.f32 %v236, %v1035
  %v1037 = vrcp.pop %v592
  %v1038 = vmul.f32 %v592, %v1037
  %v1039 = vsub.f32 1.0, %v1038
  %v1040 = vmul.f32 %v1037, %v1039
  %v1041 = vadd.f32 %v1037, %v1040
  %vm1042 = vweird.f32 %v592
  %vm1043 = vweird.f32 %v1037
  %vm1044 = vmor %vm1042, %vm1043
  %v1045 = vsel %vm1044, %v1037, %v1041
  %v1046 = vand.u32 2147483647, %v592
  %vm1047 = vcmp.eq.f32.partialorder %v1046, 8.507059e+37
  %v1048 = vand.u32 %v592, 2147483648
  %v1049 = vor.u32 1.1754944e-38, %v1048
  %v1050 = vsel %vm1047, %v1049, %v1045
  %v1051 = vmul.f32 %v243, %v1050
  %v1052 = vrcp.pop %v555
  %v1053 = vmul.f32 %v555, %v1052
  %v1054 = vsub.f32 1.0, %v1053
  %v1055 = vmul.f32 %v1052, %v1054
  %v1056 = vadd.f32 %v1052, %v1055
  %vm1057 = vweird.f32 %v555
  %vm1058 = vweird.f32 %v1052
  %vm1059 = vmor %vm1057, %vm1058
  %v1060 = vsel %vm1059, %v1052, %v1056
  %v1061 = vand.u32 2147483647, %v555
  %vm1062 = vcmp.eq.f32.partialorder %v1061, 8.507059e+37
  %v1063 = vand.u32 %v555, 2147483648
  %v1064 = vor.u32 1.1754944e-38, %v1063
  %v1065 = vsel %vm1062, %v1064, %v1060
  %v1066 = vmul.f32 %v250, %v1065
  %v1067 = vrcp.pop %v593
  %v1068 = vmul.f32 %v593, %v1067
  %v1069 = vsub.f32 1.0, %v1068
  %v1070 = vmul.f32 %v1067, %v1069
  %v1071 = vadd.f32 %v1067, %v1070
  %vm1072 = vweird.f32 %v593
  %vm1073 = vweird.f32 %v1067
  %vm1074 = vmor %vm1072, %vm1073
  %v1075 = vsel %vm1074, %v1067, %v1071
  %v1076 = vand.u32 2147483647, %v593
  %vm1077 = vcmp.eq.f32.partialorder %v1076, 8.507059e+37
  %v1078 = vand.u32 %v593, 2147483648
  %v1079 = vor.u32 1.1754944e-38, %v1078
  %v1080 = vsel %vm1077, %v1079, %v1075
  %v1081 = vmul.f32 %v257, %v1080
  %v1082 = vrcp.pop %v594
  %v1083 = vmul.f32 %v594, %v1082
  %v1084 = vsub.f32 1.0, %v1083
  %v1085 = vmul.f32 %v1082, %v1084
  %v1086 = vadd.f32 %v1082, %v1085
  %vm1087 = vweird.f32 %v594
  %vm1088 = vweird.f32 %v1082
  %vm1089 = vmor %vm1087, %vm1088
  %v1090 = vsel %vm1089, %v1082, %v1086
  %v1091 = vand.u32 2147483647, %v594
  %vm1092 = vcmp.eq.f32.partialorder %v1091, 8.507059e+37
  %v1093 = vand.u32 %v594, 2147483648
  %v1094 = vor.u32 1.1754944e-38, %v1093
  %v1095 = vsel %vm1092, %v1094, %v1090
  %v1096 = vmul.f32 %v264, %v1095
  %v1097 = vrcp.pop %v595
  %v1098 = vmul.f32 %v595, %v1097
  %v1099 = vsub.f32 1.0, %v1098
  %v1100 = vmul.f32 %v1097, %v1099
  %v1101 = vadd.f32 %v1097, %v1100
  %vm1102 = vweird.f32 %v595
  %vm1103 = vweird.f32 %v1097
  %vm1104 = vmor %vm1102, %vm1103
  %v1105 = vsel %vm1104, %v1097, %v1101
  %v1106 = vand.u32 2147483647, %v595
  %vm1107 = vcmp.eq.f32.partialorder %v1106, 8.507059e+37
  %v1108 = vand.u32 %v595, 2147483648
  %v1109 = vor.u32 1.1754944e-38, %v1108
  %v1110 = vsel %vm1107, %v1109, %v1105
  %v1111 = vmul.f32 %v271, %v1110
  %v1112 = vrcp.pop %v596
  %v1113 = vmul.f32 %v596, %v1112
  %v1114 = vsub.f32 1.0, %v1113
  %v1115 = vmul.f32 %v1112, %v1114
  %v1116 = vadd.f32 %v1112, %v1115
  %vm1117 = vweird.f32 %v596
  %vm1118 = vweird.f32 %v1112
  %vm1119 = vmor %vm1117, %vm1118
  %v1120 = vsel %vm1119, %v1112, %v1116
  %v1121 = vand.u32 2147483647, %v596
  %vm1122 = vcmp.eq.f32.partialorder %v1121, 8.507059e+37
  %v1123 = vand.u32 %v596, 2147483648
  %v1124 = vor.u32 1.1754944e-38, %v1123
  %v1125 = vsel %vm1122, %v1124, %v1120
  %v1126 = vmul.f32 %v278, %v1125
  %v1127 = vrcp.pop %v597
  %v1128 = vmul.f32 %v597, %v1127
  %v1129 = vsub.f32 1.0, %v1128
  %v1130 = vmul.f32 %v1127, %v1129
  %v1131 = vadd.f32 %v1127, %v1130
  %vm1132 = vweird.f32 %v597
  %vm1133 = vweird.f32 %v1127
  %vm1134 = vmor %vm1132, %vm1133
  %v1135 = vsel %vm1134, %v1127, %v1131
  %v1136 = vand.u32 2147483647, %v597
  %vm1137 = vcmp.eq.f32.partialorder %v1136, 8.507059e+37
  %v1138 = vand.u32 %v597, 2147483648
  %v1139 = vor.u32 1.1754944e-38, %v1138
  %v1140 = vsel %vm1137, %v1139, %v1135
  %v1141 = vmul.f32 %v285, %v1140
  %v1142 = vrcp.pop %v598
  %v1143 = vmul.f32 %v598, %v1142
  %v1144 = vsub.f32 1.0, %v1143
  %v1145 = vmul.f32 %v1142, %v1144
  %v1146 = vadd.f32 %v1142, %v1145
  %vm1147 = vweird.f32 %v598
  %vm1148 = vweird.f32 %v1142
  %vm1149 = vmor %vm1147, %vm1148
  %v1150 = vsel %vm1149, %v1142, %v1146
  %v1151 = vand.u32 2147483647, %v598
  %vm1152 = vcmp.eq.f32.partialorder %v1151, 8.507059e+37
  %v1153 = vand.u32 %v598, 2147483648
  %v1154 = vor.u32 1.1754944e-38, %v1153
  %v1155 = vsel %vm1152, %v1154, %v1150
  %v1156 = vmul.f32 %v292, %v1155
  %v1157 = vrcp.pop %v599
  %v1158 = vmul.f32 %v599, %v1157
  %v1159 = vsub.f32 1.0, %v1158
  %v1160 = vmul.f32 %v1157, %v1159
  %v1161 = vadd.f32 %v1157, %v1160
  %vm1162 = vweird.f32 %v599
  %vm1163 = vweird.f32 %v1157
  %vm1164 = vmor %vm1162, %vm1163
  %v1165 = vsel %vm1164, %v1157, %v1161
  %v1166 = vand.u32 2147483647, %v599
  %vm1167 = vcmp.eq.f32.partialorder %v1166, 8.507059e+37
  %v1168 = vand.u32 %v599, 2147483648
  %v1169 = vor.u32 1.1754944e-38, %v1168
  %v1170 = vsel %vm1167, %v1169, %v1165
  %v1171 = vmul.f32 %v299, %v1170
  %v1172 = vrcp.pop %v559
  %v1173 = vmul.f32 %v559, %v1172
  %v1174 = vsub.f32 1.0, %v1173
  %v1175 = vmul.f32 %v1172, %v1174
  %v1176 = vadd.f32 %v1172, %v1175
  %vm1177 = vweird.f32 %v559
  %vm1178 = vweird.f32 %v1172
  %vm1179 = vmor %vm1177, %vm1178
  %v1180 = vsel %vm1179, %v1172, %v1176
  %v1181 = vand.u32 2147483647, %v559
  %vm1182 = vcmp.eq.f32.partialorder %v1181, 8.507059e+37
  %v1183 = vand.u32 %v559, 2147483648
  %v1184 = vor.u32 1.1754944e-38, %v1183
  %v1185 = vsel %vm1182, %v1184, %v1180
  %v1186 = vmul.f32 %v306, %v1185
  %v1187 = vrcp.pop %v600
  %v1188 = vmul.f32 %v600, %v1187
  %v1189 = vsub.f32 1.0, %v1188
  %v1190 = vmul.f32 %v1187, %v1189
  %v1191 = vadd.f32 %v1187, %v1190
  %vm1192 = vweird.f32 %v600
  %vm1193 = vweird.f32 %v1187
  %vm1194 = vmor %vm1192, %vm1193
  %v1195 = vsel %vm1194, %v1187, %v1191
  %v1196 = vand.u32 2147483647, %v600
  %vm1197 = vcmp.eq.f32.partialorder %v1196, 8.507059e+37
  %v1198 = vand.u32 %v600, 2147483648
  %v1199 = vor.u32 1.1754944e-38, %v1198
  %v1200 = vsel %vm1197, %v1199, %v1195
  %v1201 = vmul.f32 %v313, %v1200
  %v1202 = vrcp.pop %v601
  %v1203 = vmul.f32 %v601, %v1202
  %v1204 = vsub.f32 1.0, %v1203
  %v1205 = vmul.f32 %v1202, %v1204
  %v1206 = vadd.f32 %v1202, %v1205
  %vm1207 = vweird.f32 %v601
  %vm1208 = vweird.f32 %v1202
  %vm1209 = vmor %vm1207, %vm1208
  %v1210 = vsel %vm1209, %v1202, %v1206
  %v1211 = vand.u32 2147483647, %v601
  %vm1212 = vcmp.eq.f32.partialorder %v1211, 8.507059e+37
  %v1213 = vand.u32 %v601, 2147483648
  %v1214 = vor.u32 1.1754944e-38, %v1213
  %v1215 = vsel %vm1212, %v1214, %v1210
  %v1216 = vmul.f32 %v320, %v1215
  %v1217 = vrcp.pop %v602
  %v1218 = vmul.f32 %v602, %v1217
  %v1219 = vsub.f32 1.0, %v1218
  %v1220 = vmul.f32 %v1217, %v1219
  %v1221 = vadd.f32 %v1217, %v1220
  %vm1222 = vweird.f32 %v602
  %vm1223 = vweird.f32 %v1217
  %vm1224 = vmor %vm1222, %vm1223
  %v1225 = vsel %vm1224, %v1217, %v1221
  %v1226 = vand.u32 2147483647, %v602
  %vm1227 = vcmp.eq.f32.partialorder %v1226, 8.507059e+37
  %v1228 = vand.u32 %v602, 2147483648
  %v1229 = vor.u32 1.1754944e-38, %v1228
  %v1230 = vsel %vm1227, %v1229, %v1225
  %v1231 = vmul.f32 %v327, %v1230
  %v1232 = vrcp.pop %v603
  %v1233 = vmul.f32 %v603, %v1232
  %v1234 = vsub.f32 1.0, %v1233
  %v1235 = vmul.f32 %v1232, %v1234
  %v1236 = vadd.f32 %v1232, %v1235
  %vm1237 = vweird.f32 %v603
  %vm1238 = vweird.f32 %v1232
  %vm1239 = vmor %vm1237, %vm1238
  %v1240 = vsel %vm1239, %v1232, %v1236
  %v1241 = vand.u32 2147483647, %v603
  %vm1242 = vcmp.eq.f32.partialorder %v1241, 8.507059e+37
  %v1243 = vand.u32 %v603, 2147483648
  %v1244 = vor.u32 1.1754944e-38, %v1243
  %v1245 = vsel %vm1242, %v1244, %v1240
  %v1246 = vmul.f32 %v334, %v1245
  %v1247 = vrcp.pop %v604
  %v1248 = vmul.f32 %v604, %v1247
  %v1249 = vsub.f32 1.0, %v1248
  %v1250 = vmul.f32 %v1247, %v1249
  %v1251 = vadd.f32 %v1247, %v1250
  %vm1252 = vweird.f32 %v604
  %vm1253 = vweird.f32 %v1247
  %vm1254 = vmor %vm1252, %vm1253
  %v1255 = vsel %vm1254, %v1247, %v1251
  %v1256 = vand.u32 2147483647, %v604
  %vm1257 = vcmp.eq.f32.partialorder %v1256, 8.507059e+37
  %v1258 = vand.u32 %v604, 2147483648
  %v1259 = vor.u32 1.1754944e-38, %v1258
  %v1260 = vsel %vm1257, %v1259, %v1255
  %v1261 = vmul.f32 %v341, %v1260
  %v1262 = vrcp.pop %v605
  %v1263 = vmul.f32 %v605, %v1262
  %v1264 = vsub.f32 1.0, %v1263
  %v1265 = vmul.f32 %v1262, %v1264
  %v1266 = vadd.f32 %v1262, %v1265
  %vm1267 = vweird.f32 %v605
  %vm1268 = vweird.f32 %v1262
  %vm1269 = vmor %vm1267, %vm1268
  %v1270 = vsel %vm1269, %v1262, %v1266
  %v1271 = vand.u32 2147483647, %v605
  %vm1272 = vcmp.eq.f32.partialorder %v1271, 8.507059e+37
  %v1273 = vand.u32 %v605, 2147483648
  %v1274 = vor.u32 1.1754944e-38, %v1273
  %v1275 = vsel %vm1272, %v1274, %v1270
  %v1276 = vmul.f32 %v348, %v1275
  %v1277 = vrcp.pop %v606
  %v1278 = vmul.f32 %v606, %v1277
  %v1279 = vsub.f32 1.0, %v1278
  %v1280 = vmul.f32 %v1277, %v1279
  %v1281 = vadd.f32 %v1277, %v1280
  %vm1282 = vweird.f32 %v606
  %vm1283 = vweird.f32 %v1277
  %vm1284 = vmor %vm1282, %vm1283
  %v1285 = vsel %vm1284, %v1277, %v1281
  %v1286 = vand.u32 2147483647, %v606
  %vm1287 = vcmp.eq.f32.partialorder %v1286, 8.507059e+37
  %v1288 = vand.u32 %v606, 2147483648
  %v1289 = vor.u32 1.1754944e-38, %v1288
  %v1290 = vsel %vm1287, %v1289, %v1285
  %v1291 = vmul.f32 %v355, %v1290
  %v1292 = vrcp.pop %v563
  %v1293 = vmul.f32 %v563, %v1292
  %v1294 = vsub.f32 1.0, %v1293
  %v1295 = vmul.f32 %v1292, %v1294
  %v1296 = vadd.f32 %v1292, %v1295
  %vm1297 = vweird.f32 %v563
  %vm1298 = vweird.f32 %v1292
  %vm1299 = vmor %vm1297, %vm1298
  %v1300 = vsel %vm1299, %v1292, %v1296
  %v1301 = vand.u32 2147483647, %v563
  %vm1302 = vcmp.eq.f32.partialorder %v1301, 8.507059e+37
  %v1303 = vand.u32 %v563, 2147483648
  %v1304 = vor.u32 1.1754944e-38, %v1303
  %v1305 = vsel %vm1302, %v1304, %v1300
  %v1306 = vmul.f32 %v362, %v1305
  %v1307 = vrcp.pop %v607
  %v1308 = vmul.f32 %v607, %v1307
  %v1309 = vsub.f32 1.0, %v1308
  %v1310 = vmul.f32 %v1307, %v1309
  %v1311 = vadd.f32 %v1307, %v1310
  %vm1312 = vweird.f32 %v607
  %vm1313 = vweird.f32 %v1307
  %vm1314 = vmor %vm1312, %vm1313
  %v1315 = vsel %vm1314, %v1307, %v1311
  %v1316 = vand.u32 2147483647, %v607
  %vm1317 = vcmp.eq.f32.partialorder %v1316, 8.507059e+37
  %v1318 = vand.u32 %v607, 2147483648
  %v1319 = vor.u32 1.1754944e-38, %v1318
  %v1320 = vsel %vm1317, %v1319, %v1315
  %v1321 = vmul.f32 %v369, %v1320
  %v1322 = vrcp.pop %v608
  %v1323 = vmul.f32 %v608, %v1322
  %v1324 = vsub.f32 1.0, %v1323
  %v1325 = vmul.f32 %v1322, %v1324
  %v1326 = vadd.f32 %v1322, %v1325
  %vm1327 = vweird.f32 %v608
  %vm1328 = vweird.f32 %v1322
  %vm1329 = vmor %vm1327, %vm1328
  %v1330 = vsel %vm1329, %v1322, %v1326
  %v1331 = vand.u32 2147483647, %v608
  %vm1332 = vcmp.eq.f32.partialorder %v1331, 8.507059e+37
  %v1333 = vand.u32 %v608, 2147483648
  %v1334 = vor.u32 1.1754944e-38, %v1333
  %v1335 = vsel %vm1332, %v1334, %v1330
  %v1336 = vmul.f32 %v376, %v1335
  %v1337 = vrcp.pop %v609
  %v1338 = vmul.f32 %v609, %v1337
  %v1339 = vsub.f32 1.0, %v1338
  %v1340 = vmul.f32 %v1337, %v1339
  %v1341 = vadd.f32 %v1337, %v1340
  %vm1342 = vweird.f32 %v609
  %vm1343 = vweird.f32 %v1337
  %vm1344 = vmor %vm1342, %vm1343
  %v1345 = vsel %vm1344, %v1337, %v1341
  %v1346 = vand.u32 2147483647, %v609
  %vm1347 = vcmp.eq.f32.partialorder %v1346, 8.507059e+37
  %v1348 = vand.u32 %v609, 2147483648
  %v1349 = vor.u32 1.1754944e-38, %v1348
  %v1350 = vsel %vm1347, %v1349, %v1345
  %v1351 = vmul.f32 %v383, %v1350
  %v1352 = vrcp.pop %v610
  %v1353 = vmul.f32 %v610, %v1352
  %v1354 = vsub.f32 1.0, %v1353
  %v1355 = vmul.f32 %v1352, %v1354
  %v1356 = vadd.f32 %v1352, %v1355
  %vm1357 = vweird.f32 %v610
  %vm1358 = vweird.f32 %v1352
  %vm1359 = vmor %vm1357, %vm1358
  %v1360 = vsel %vm1359, %v1352, %v1356
  %v1361 = vand.u32 2147483647, %v610
  %vm1362 = vcmp.eq.f32.partialorder %v1361, 8.507059e+37
  %v1363 = vand.u32 %v610, 2147483648
  %v1364 = vor.u32 1.1754944e-38, %v1363
  %v1365 = vsel %vm1362, %v1364, %v1360
  %v1366 = vmul.f32 %v390, %v1365
  %v1367 = vrcp.pop %v611
  %v1368 = vmul.f32 %v611, %v1367
  %v1369 = vsub.f32 1.0, %v1368
  %v1370 = vmul.f32 %v1367, %v1369
  %v1371 = vadd.f32 %v1367, %v1370
  %vm1372 = vweird.f32 %v611
  %vm1373 = vweird.f32 %v1367
  %vm1374 = vmor %vm1372, %vm1373
  %v1375 = vsel %vm1374, %v1367, %v1371
  %v1376 = vand.u32 2147483647, %v611
  %vm1377 = vcmp.eq.f32.partialorder %v1376, 8.507059e+37
  %v1378 = vand.u32 %v611, 2147483648
  %v1379 = vor.u32 1.1754944e-38, %v1378
  %v1380 = vsel %vm1377, %v1379, %v1375
  %v1381 = vmul.f32 %v397, %v1380
  %v1382 = vrcp.pop %v612
  %v1383 = vmul.f32 %v612, %v1382
  %v1384 = vsub.f32 1.0, %v1383
  %v1385 = vmul.f32 %v1382, %v1384
  %v1386 = vadd.f32 %v1382, %v1385
  %vm1387 = vweird.f32 %v612
  %vm1388 = vweird.f32 %v1382
  %vm1389 = vmor %vm1387, %vm1388
  %v1390 = vsel %vm1389, %v1382, %v1386
  %v1391 = vand.u32 2147483647, %v612
  %vm1392 = vcmp.eq.f32.partialorder %v1391, 8.507059e+37
  %v1393 = vand.u32 %v612, 2147483648
  %v1394 = vor.u32 1.1754944e-38, %v1393
  %v1395 = vsel %vm1392, %v1394, %v1390
  %v1396 = vmul.f32 %v404, %v1395
  %v1397 = vrcp.pop %v613
  %v1398 = vmul.f32 %v613, %v1397
  %v1399 = vsub.f32 1.0, %v1398
  %v1400 = vmul.f32 %v1397, %v1399
  %v1401 = vadd.f32 %v1397, %v1400
  %vm1402 = vweird.f32 %v613
  %vm1403 = vweird.f32 %v1397
  %vm1404 = vmor %vm1402, %vm1403
  %v1405 = vsel %vm1404, %v1397, %v1401
  %v1406 = vand.u32 2147483647, %v613
  %vm1407 = vcmp.eq.f32.partialorder %v1406, 8.507059e+37
  %v1408 = vand.u32 %v613, 2147483648
  %v1409 = vor.u32 1.1754944e-38, %v1408
  %v1410 = vsel %vm1407, %v1409, %v1405
  %v1411 = vmul.f32 %v411, %v1410
  %v1412 = vrcp.pop %v567
  %v1413 = vmul.f32 %v567, %v1412
  %v1414 = vsub.f32 1.0, %v1413
  %v1415 = vmul.f32 %v1412, %v1414
  %v1416 = vadd.f32 %v1412, %v1415
  %vm1417 = vweird.f32 %v567
  %vm1418 = vweird.f32 %v1412
  %vm1419 = vmor %vm1417, %vm1418
  %v1420 = vsel %vm1419, %v1412, %v1416
  %v1421 = vand.u32 2147483647, %v567
  %vm1422 = vcmp.eq.f32.partialorder %v1421, 8.507059e+37
  %v1423 = vand.u32 %v567, 2147483648
  %v1424 = vor.u32 1.1754944e-38, %v1423
  %v1425 = vsel %vm1422, %v1424, %v1420
  %v1426 = vmul.f32 %v418, %v1425
  %v1427 = vrcp.pop %v614
  %v1428 = vmul.f32 %v614, %v1427
  %v1429 = vsub.f32 1.0, %v1428
  %v1430 = vmul.f32 %v1427, %v1429
  %v1431 = vadd.f32 %v1427, %v1430
  %vm1432 = vweird.f32 %v614
  %vm1433 = vweird.f32 %v1427
  %vm1434 = vmor %vm1432, %vm1433
  %v1435 = vsel %vm1434, %v1427, %v1431
  %v1436 = vand.u32 2147483647, %v614
  %vm1437 = vcmp.eq.f32.partialorder %v1436, 8.507059e+37
  %v1438 = vand.u32 %v614, 2147483648
  %v1439 = vor.u32 1.1754944e-38, %v1438
  %v1440 = vsel %vm1437, %v1439, %v1435
  %v1441 = vmul.f32 %v425, %v1440
  %v1442 = vrcp.pop %v615
  %v1443 = vmul.f32 %v615, %v1442
  %v1444 = vsub.f32 1.0, %v1443
  %v1445 = vmul.f32 %v1442, %v1444
  %v1446 = vadd.f32 %v1442, %v1445
  %vm1447 = vweird.f32 %v615
  %vm1448 = vweird.f32 %v1442
  %vm1449 = vmor %vm1447, %vm1448
  %v1450 = vsel %vm1449, %v1442, %v1446
  %v1451 = vand.u32 2147483647, %v615
  %vm1452 = vcmp.eq.f32.partialorder %v1451, 8.507059e+37
  %v1453 = vand.u32 %v615, 2147483648
  %v1454 = vor.u32 1.1754944e-38, %v1453
  %v1455 = vsel %vm1452, %v1454, %v1450
  %v1456 = vmul.f32 %v432, %v1455
  %v1457 = vrcp.pop %v616
  %v1458 = vmul.f32 %v616, %v1457
  %v1459 = vsub.f32 1.0, %v1458
  %v1460 = vmul.f32 %v1457, %v1459
  %v1461 = vadd.f32 %v1457, %v1460
  %vm1462 = vweird.f32 %v616
  %vm1463 = vweird.f32 %v1457
  %vm1464 = vmor %vm1462, %vm1463
  %v1465 = vsel %vm1464, %v1457, %v1461
  %v1466 = vand.u32 2147483647, %v616
  %vm1467 = vcmp.eq.f32.partialorder %v1466, 8.507059e+37
  %v1468 = vand.u32 %v616, 2147483648
  %v1469 = vor.u32 1.1754944e-38, %v1468
  %v1470 = vsel %vm1467, %v1469, %v1465
  %v1471 = vmul.f32 %v439, %v1470
  %v1472 = vrcp.pop %v617
  %v1473 = vmul.f32 %v617, %v1472
  %v1474 = vsub.f32 1.0, %v1473
  %v1475 = vmul.f32 %v1472, %v1474
  %v1476 = vadd.f32 %v1472, %v1475
  %vm1477 = vweird.f32 %v617
  %vm1478 = vweird.f32 %v1472
  %vm1479 = vmor %vm1477, %vm1478
  %v1480 = vsel %vm1479, %v1472, %v1476
  %v1481 = vand.u32 2147483647, %v617
  %vm1482 = vcmp.eq.f32.partialorder %v1481, 8.507059e+37
  %v1483 = vand.u32 %v617, 2147483648
  %v1484 = vor.u32 1.1754944e-38, %v1483
  %v1485 = vsel %vm1482, %v1484, %v1480
  %v1486 = vmul.f32 %v446, %v1485
  %v1487 = vrcp.pop %v618
  %v1488 = vmul.f32 %v618, %v1487
  %v1489 = vsub.f32 1.0, %v1488
  %v1490 = vmul.f32 %v1487, %v1489
  %v1491 = vadd.f32 %v1487, %v1490
  %vm1492 = vweird.f32 %v618
  %vm1493 = vweird.f32 %v1487
  %vm1494 = vmor %vm1492, %vm1493
  %v1495 = vsel %vm1494, %v1487, %v1491
  %v1496 = vand.u32 2147483647, %v618
  %vm1497 = vcmp.eq.f32.partialorder %v1496, 8.507059e+37
  %v1498 = vand.u32 %v618, 2147483648
  %v1499 = vor.u32 1.1754944e-38, %v1498
  %v1500 = vsel %vm1497, %v1499, %v1495
  %v1501 = vmul.f32 %v453, %v1500
  %v1502 = vrcp.pop %v619
  %v1503 = vmul.f32 %v619, %v1502
  %v1504 = vsub.f32 1.0, %v1503
  %v1505 = vmul.f32 %v1502, %v1504
  %v1506 = vadd.f32 %v1502, %v1505
  %vm1507 = vweird.f32 %v619
  %vm1508 = vweird.f32 %v1502
  %vm1509 = vmor %vm1507, %vm1508
  %v1510 = vsel %vm1509, %v1502, %v1506
  %v1511 = vand.u32 2147483647, %v619
  %vm1512 = vcmp.eq.f32.partialorder %v1511, 8.507059e+37
  %v1513 = vand.u32 %v619, 2147483648
  %v1514 = vor.u32 1.1754944e-38, %v1513
  %v1515 = vsel %vm1512, %v1514, %v1510
  %v1516 = vmul.f32 %v460, %v1515
  %v1517 = vrcp.pop %v620
  %v1518 = vmul.f32 %v620, %v1517
  %v1519 = vsub.f32 1.0, %v1518
  %v1520 = vmul.f32 %v1517, %v1519
  %v1521 = vadd.f32 %v1517, %v1520
  %vm1522 = vweird.f32 %v620
  %vm1523 = vweird.f32 %v1517
  %vm1524 = vmor %vm1522, %vm1523
  %v1525 = vsel %vm1524, %v1517, %v1521
  %v1526 = vand.u32 2147483647, %v620
  %vm1527 = vcmp.eq.f32.partialorder %v1526, 8.507059e+37
  %v1528 = vand.u32 %v620, 2147483648
  %v1529 = vor.u32 1.1754944e-38, %v1528
  %v1530 = vsel %vm1527, %v1529, %v1525
  %v1531 = vmul.f32 %v467, %v1530
  %v1532 = vrcp.pop %v571
  %v1533 = vmul.f32 %v571, %v1532
  %v1534 = vsub.f32 1.0, %v1533
  %v1535 = vmul.f32 %v1532, %v1534
  %v1536 = vadd.f32 %v1532, %v1535
  %vm1537 = vweird.f32 %v571
  %vm1538 = vweird.f32 %v1532
  %vm1539 = vmor %vm1537, %vm1538
  %v1540 = vsel %vm1539, %v1532, %v1536
  %v1541 = vand.u32 2147483647, %v571
  %vm1542 = vcmp.eq.f32.partialorder %v1541, 8.507059e+37
  %v1543 = vand.u32 %v571, 2147483648
  %v1544 = vor.u32 1.1754944e-38, %v1543
  %v1545 = vsel %vm1542, %v1544, %v1540
  %v1546 = vmul.f32 %v474, %v1545
  %v1547 = vrcp.pop %v621
  %v1548 = vmul.f32 %v621, %v1547
  %v1549 = vsub.f32 1.0, %v1548
  %v1550 = vmul.f32 %v1547, %v1549
  %v1551 = vadd.f32 %v1547, %v1550
  %vm1552 = vweird.f32 %v621
  %vm1553 = vweird.f32 %v1547
  %vm1554 = vmor %vm1552, %vm1553
  %v1555 = vsel %vm1554, %v1547, %v1551
  %v1556 = vand.u32 2147483647, %v621
  %vm1557 = vcmp.eq.f32.partialorder %v1556, 8.507059e+37
  %v1558 = vand.u32 %v621, 2147483648
  %v1559 = vor.u32 1.1754944e-38, %v1558
  %v1560 = vsel %vm1557, %v1559, %v1555
  %v1561 = vmul.f32 %v481, %v1560
  %v1562 = vrcp.pop %v622
  %v1563 = vmul.f32 %v622, %v1562
  %v1564 = vsub.f32 1.0, %v1563
  %v1565 = vmul.f32 %v1562, %v1564
  %v1566 = vadd.f32 %v1562, %v1565
  %vm1567 = vweird.f32 %v622
  %vm1568 = vweird.f32 %v1562
  %vm1569 = vmor %vm1567, %vm1568
  %v1570 = vsel %vm1569, %v1562, %v1566
  %v1571 = vand.u32 2147483647, %v622
  %vm1572 = vcmp.eq.f32.partialorder %v1571, 8.507059e+37
  %v1573 = vand.u32 %v622, 2147483648
  %v1574 = vor.u32 1.1754944e-38, %v1573
  %v1575 = vsel %vm1572, %v1574, %v1570
  %v1576 = vmul.f32 %v488, %v1575
  %v1577 = vrcp.pop %v623
  %v1578 = vmul.f32 %v623, %v1577
  %v1579 = vsub.f32 1.0, %v1578
  %v1580 = vmul.f32 %v1577, %v1579
  %v1581 = vadd.f32 %v1577, %v1580
  %vm1582 = vweird.f32 %v623
  %vm1583 = vweird.f32 %v1577
  %vm1584 = vmor %vm1582, %vm1583
  %v1585 = vsel %vm1584, %v1577, %v1581
  %v1586 = vand.u32 2147483647, %v623
  %vm1587 = vcmp.eq.f32.partialorder %v1586, 8.507059e+37
  %v1588 = vand.u32 %v623, 2147483648
  %v1589 = vor.u32 1.1754944e-38, %v1588
  %v1590 = vsel %vm1587, %v1589, %v1585
  %v1591 = vmul.f32 %v495, %v1590
  %v1592 = vrcp.pop %v624
  %v1593 = vmul.f32 %v624, %v1592
  %v1594 = vsub.f32 1.0, %v1593
  %v1595 = vmul.f32 %v1592, %v1594
  %v1596 = vadd.f32 %v1592, %v1595
  %vm1597 = vweird.f32 %v624
  %vm1598 = vweird.f32 %v1592
  %vm1599 = vmor %vm1597, %vm1598
  %v1600 = vsel %vm1599, %v1592, %v1596
  %v1601 = vand.u32 2147483647, %v624
  %vm1602 = vcmp.eq.f32.partialorder %v1601, 8.507059e+37
  %v1603 = vand.u32 %v624, 2147483648
  %v1604 = vor.u32 1.1754944e-38, %v1603
  %v1605 = vsel %vm1602, %v1604, %v1600
  %v1606 = vmul.f32 %v502, %v1605
  %v1607 = vrcp.pop %v625
  %v1608 = vmul.f32 %v625, %v1607
  %v1609 = vsub.f32 1.0, %v1608
  %v1610 = vmul.f32 %v1607, %v1609
  %v1611 = vadd.f32 %v1607, %v1610
  %vm1612 = vweird.f32 %v625
  %vm1613 = vweird.f32 %v1607
  %vm1614 = vmor %vm1612, %vm1613
  %v1615 = vsel %vm1614, %v1607, %v1611
  %v1616 = vand.u32 2147483647, %v625
  %vm1617 = vcmp.eq.f32.partialorder %v1616, 8.507059e+37
  %v1618 = vand.u32 %v625, 2147483648
  %v1619 = vor.u32 1.1754944e-38, %v1618
  %v1620 = vsel %vm1617, %v1619, %v1615
  %v1621 = vmul.f32 %v509, %v1620
  %v1622 = vrcp.pop %v626
  %v1623 = vmul.f32 %v626, %v1622
  %v1624 = vsub.f32 1.0, %v1623
  %v1625 = vmul.f32 %v1622, %v1624
  %v1626 = vadd.f32 %v1622, %v1625
  %vm1627 = vweird.f32 %v626
  %vm1628 = vweird.f32 %v1622
  %vm1629 = vmor %vm1627, %vm1628
  %v1630 = vsel %vm1629, %v1622, %v1626
  %v1631 = vand.u32 2147483647, %v626
  %vm1632 = vcmp.eq.f32.partialorder %v1631, 8.507059e+37
  %v1633 = vand.u32 %v626, 2147483648
  %v1634 = vor.u32 1.1754944e-38, %v1633
  %v1635 = vsel %vm1632, %v1634, %v1630
  %v1636 = vmul.f32 %v516, %v1635
  %v1637 = vrcp.pop %v627
  %v1638 = vmul.f32 %v627, %v1637
  %v1639 = vsub.f32 1.0, %v1638
  %v1640 = vmul.f32 %v1637, %v1639
  %v1641 = vadd.f32 %v1637, %v1640
  %vm1642 = vweird.f32 %v627
  %vm1643 = vweird.f32 %v1637
  %vm1644 = vmor %vm1642, %vm1643
  %v1645 = vsel %vm1644, %v1637, %v1641
  %v1646 = vand.u32 2147483647, %v627
  %vm1647 = vcmp.eq.f32.partialorder %v1646, 8.507059e+37
  %v1648 = vand.u32 %v627, 2147483648
  %v1649 = vor.u32 1.1754944e-38, %v1648
  %v1650 = vsel %vm1647, %v1649, %v1645
  %v1651 = vmul.f32 %v523, %v1650
  %v1716 = vrot.slane %v721, 7
  %vm1717 = vcmask 1041409
  %v1718 = vsel %vm1717, %v1716, %v706
  %v1719 = vrot.slane %v736, 6
  %vm1720 = vcmask 1042434
  %v1721 = vsel %vm1720, %v1719, %v1718
  %v1722 = vrot.slane %v751, 5
  %vm1723 = vcmask 1043459
  %v1724 = vsel %vm1723, %v1722, %v1721
  %v1725 = vrot.slane %v766, 4
  %vm1726 = vcmask 1044484
  %v1727 = vsel %vm1726, %v1725, %v1724
  %v1728 = vrot.slane %v781, 3
  %vm1729 = vcmask 1045509
  %v1730 = vsel %vm1729, %v1728, %v1727
  %v1731 = vrot.slane %v796, 2
  %vm1732 = vcmask 1046534
  %v1733 = vsel %vm1732, %v1731, %v1730
  %v1734 = vrot.slane %v811, 1
  %vm1735 = vcmask 1047559
  %v1736 = vsel %vm1735, %v1734, %v1733
  %v1737 = vrot.slane %v841, 7
  %v1738 = vsel %vm1717, %v1737, %v826
  %v1739 = vrot.slane %v856, 6
  %v1740 = vsel %vm1720, %v1739, %v1738
  %v1741 = vrot.slane %v871, 5
  %v1742 = vsel %vm1723, %v1741, %v1740
  %v1743 = vrot.slane %v886, 4
  %v1744 = vsel %vm1726, %v1743, %v1742
  %v1745 = vrot.slane %v901, 3
  %v1746 = vsel %vm1729, %v1745, %v1744
  %v1747 = vrot.slane %v916, 2
  %v1748 = vsel %vm1732, %v1747, %v1746
  %v1749 = vrot.slane %v931, 1
  %v1750 = vsel %vm1735, %v1749, %v1748
  %v1751 = vrot.slane %v961, 7
  %v1752 = vsel %vm1717, %v1751, %v946
  %v1753 = vrot.slane %v976, 6
  %v1754 = vsel %vm1720, %v1753, %v1752
  %v1755 = vrot.slane %v991, 5
  %v1756 = vsel %vm1723, %v1755, %v1754
  %v1757 = vrot.slane %v1006, 4
  %v1758 = vsel %vm1726, %v1757, %v1756
  %v1759 = vrot.slane %v1021, 3
  %v1760 = vsel %vm1729, %v1759, %v1758
  %v1761 = vrot.slane %v1036, 2
  %v1762 = vsel %vm1732, %v1761, %v1760
  %v1763 = vrot.slane %v1051, 1
  %v1764 = vsel %vm1735, %v1763, %v1762
  %v1765 = vrot.slane %v1081, 7
  %v1766 = vsel %vm1717, %v1765, %v1066
  %v1767 = vrot.slane %v1096, 6
  %v1768 = vsel %vm1720, %v1767, %v1766
  %v1769 = vrot.slane %v1111, 5
  %v1770 = vsel %vm1723, %v1769, %v1768
  %v1771 = vrot.slane %v1126, 4
  %v1772 = vsel %vm1726, %v1771, %v1770
  %v1773 = vrot.slane %v1141, 3
  %v1774 = vsel %vm1729, %v1773, %v1772
  %v1775 = vrot.slane %v1156, 2
  %v1776 = vsel %vm1732, %v1775, %v1774
  %v1777 = vrot.slane %v1171, 1
  %v1778 = vsel %vm1735, %v1777, %v1776
  %v1779 = vrot.slane %v1201, 7
  %v1780 = vsel %vm1717, %v1779, %v1186
  %v1781 = vrot.slane %v1216, 6
  %v1782 = vsel %vm1720, %v1781, %v1780
  %v1783 = vrot.slane %v1231, 5
  %v1784 = vsel %vm1723, %v1783, %v1782
  %v1785 = vrot.slane %v1246, 4
  %v1786 = vsel %vm1726, %v1785, %v1784
  %v1787 = vrot.slane %v1261, 3
  %v1788 = vsel %vm1729, %v1787, %v1786
  %v1789 = vrot.slane %v1276, 2
  %v1790 = vsel %vm1732, %v1789, %v1788
  %v1791 = vrot.slane %v1291, 1
  %v1792 = vsel %vm1735, %v1791, %v1790
  %v1793 = vrot.slane %v1321, 7
  %v1794 = vsel %vm1717, %v1793, %v1306
  %v1795 = vrot.slane %v1336, 6
  %v1796 = vsel %vm1720, %v1795, %v1794
  %v1797 = vrot.slane %v1351, 5
  %v1798 = vsel %vm1723, %v1797, %v1796
  %v1799 = vrot.slane %v1366, 4
  %v1800 = vsel %vm1726, %v1799, %v1798
  %v1801 = vrot.slane %v1381, 3
  %v1802 = vsel %vm1729, %v1801, %v1800
  %v1803 = vrot.slane %v1396, 2
  %v1804 = vsel %vm1732, %v1803, %v1802
  %v1805 = vrot.slane %v1411, 1
  %v1806 = vsel %vm1735, %v1805, %v1804
  %v1807 = vrot.slane %v1441, 7
  %v1808 = vsel %vm1717, %v1807, %v1426
  %v1809 = vrot.slane %v1456, 6
  %v1810 = vsel %vm1720, %v1809, %v1808
  %v1811 = vrot.slane %v1471, 5
  %v1812 = vsel %vm1723, %v1811, %v1810
  %v1813 = vrot.slane %v1486, 4
  %v1814 = vsel %vm1726, %v1813, %v1812
  %v1815 = vrot.slane %v1501, 3
  %v1816 = vsel %vm1729, %v1815, %v1814
  %v1817 = vrot.slane %v1516, 2
  %v1818 = vsel %vm1732, %v1817, %v1816
  %v1819 = vrot.slane %v1531, 1
  %v1820 = vsel %vm1735, %v1819, %v1818
  %v1821 = vrot.slane %v1561, 7
  %v1822 = vsel %vm1717, %v1821, %v1546
  %v1823 = vrot.slane %v1576, 6
  %v1824 = vsel %vm1720, %v1823, %v1822
  %v1825 = vrot.slane %v1591, 5
  %v1826 = vsel %vm1723, %v1825, %v1824
  %v1827 = vrot.slane %v1606, 4
  %v1828 = vsel %vm1726, %v1827, %v1826
  %v1829 = vrot.slane %v1621, 3
  %v1830 = vsel %vm1729, %v1829, %v1828
  %v1831 = vrot.slane %v1636, 2
  %v1832 = vsel %vm1732, %v1831, %v1830
  %v1833 = vrot.slane %v1651, 1
  %v1834 = vsel %vm1735, %v1833, %v1832
  %1843 = vst.msk [vmem:[%s2] sm:$0xff] %vm75, %v1736
  %1844 = vst.msk [vmem:[%s2 + $0x8] sm:$0xff] %vm75, %v1750
  %1845 = vst.msk [vmem:[%s2 + $0x10] sm:$0xff] %vm75, %v1764
  %1846 = vst.msk [vmem:[%s2 + $0x18] sm:$0xff] %vm75, %v1778
  %1847 = vst.msk [vmem:[%s2 + $0x20] sm:$0xff] %vm75, %v1792
  %1848 = vst.msk [vmem:[%s2 + $0x28] sm:$0xff] %vm75, %v1806
  %1849 = vst.msk [vmem:[%s2 + $0x30] sm:$0xff] %vm75, %v1820
  %1850 = vst.msk [vmem:[%s2 + $0x38] sm:$0xff] %vm75, %v1834
  // Predicated region
  $region10: #{tpu_custom_call.1} parent=0 // pred_check
    _
  $region11: #{tpu_custom_call.1} parent=0 // pred_check_branch
    %1852 = sbr.rel (0) target = $region13
  $region12: #{tpu_custom_call.1} parent=0 // pred_region
    _
  $region13: #{tpu_custom_call.1} parent=0 // pred_fallthru
    _
  // Predicated region
  $region14: #{tpu_custom_call.1} parent=0 // pred_check
    _
  $region15: #{tpu_custom_call.1} parent=0 // pred_check_branch
    %1854 = sbr.rel (0) target = $region17
  $region16: #{tpu_custom_call.1} parent=0 // pred_region
    _
  $region17: #{tpu_custom_call.1} parent=0 // pred_fallthru
    _

</llo_original>
